<compile_context>
chip_gen: v7x
topology: tpu7x:2x2x1
jax: 0.10.0
libtpu: 0.0.40
codegen_flags: <defaults>
</compile_context>

<pallas_src>
import jax
import jax.numpy as jnp
from jax.experimental import pallas as pl
from jax.experimental.pallas import tpu as pltpu

H = 128        # lane width / padded hidden-2 width (covers 100)
H1 = 64        # padded hidden-1 width (covers 60)
OUT_PAD = 8    # padded output sublanes (covers 7)
OUT_DIM = 7
N_SMALL_COLS = 8   # smallT columns: w1_in0, w1_in1, b1, b2, b3, (pad)


def _round_up(n, m):
    return ((n + m - 1) // m) * m


def _default_use_bf16():
    # bf16 MXU operands + bf16 tanh pay off on v6e / v7x (native bf16 VPU/EUP).
    # Keep f32 on v5e and older / unknown parts.
    try:
        kind = jax.devices()[0].device_kind.lower()
    except Exception:
        return False
    return ("v6" in kind) or ("v7" in kind) or ("7x" in kind)


def mapper_kernel(x_ref, small_ref, w2t_ref, w3t_ref, o_ref):
    # x_ref:     (2, TB)   f32      streamed batch tile (features x batch)
    # small_ref: (128, 8)  f32      col0/1: w1 input rows, col2: b1, col3: b2, col4: b3
    # w2t_ref:   (128, 64) f32|bf16 W2^T zero-padded (out 100->128, in 60->64)
    # w3t_ref:   (8, 128)  f32|bf16 W3^T zero-padded (out 7->8, in 100->128)
    # o_ref:     (8, TB)   f32      rows 0..6 real, row 7 is exactly 0
    cdt = w2t_ref.dtype
    prec = (jax.lax.Precision.HIGHEST if cdt == jnp.float32
            else jax.lax.Precision.DEFAULT)

    x = x_ref[...]                       # (2, TB) f32
    x0 = x[0:1, :]
    x1 = x[1:2, :]

    w1c0 = small_ref[0:H1, 0:1]          # (64, 1)
    w1c1 = small_ref[0:H1, 1:2]          # (64, 1)
    b1c = small_ref[0:H1, 2:3]           # (64, 1)
    b2c = small_ref[:, 3:4]              # (128, 1)
    b3c = small_ref[0:OUT_PAD, 4:5]      # (8, 1)

    # ---- Layer 1 (K=2) on the VPU: two lane-broadcast FMAs; MXU would waste
    #      >98% of a contraction pass. tanh in bf16 on v6e/v7x. ----
    h1 = jnp.tanh((w1c0 * x0 + w1c1 * x1 + b1c).astype(cdt))       # (64, TB)

    # ---- Layer 2 on the MXU: W2^T @ h1 (lane-dense features x batch). ----
    h2_pre = jnp.dot(w2t_ref[...], h1, preferred_element_type=jnp.float32,
                     precision=prec) + b2c                          # (128, TB) f32
    h2 = jnp.tanh(h2_pre.astype(cdt))

    # ---- Layer 3 on the MXU: only 8 output sublanes ever materialized. ----
    h3_pre = jnp.dot(w3t_ref[...], h2, preferred_element_type=jnp.float32,
                     precision=prec) + b3c                          # (8, TB) f32
    o_ref[...] = jnp.tanh(h3_pre).astype(o_ref.dtype)


def pack_params(w1, b1, w2, b2, w3, b3, *, use_bf16=False):
    """Pack parameters for the transposed (features x batch) kernel layout.

    w*: (in_features, out_features); b*: (out_features,).
    Zero padding is numerically inert: padded feature rows evaluate to
    tanh(0)=0 and meet zero weight columns in the next layer.
    """
    smallT = jnp.zeros((H, N_SMALL_COLS), jnp.float32)
    smallT = smallT.at[:60, 0].set(w1[0, :].astype(jnp.float32))
    smallT = smallT.at[:60, 1].set(w1[1, :].astype(jnp.float32))
    smallT = smallT.at[:60, 2].set(b1.reshape(-1).astype(jnp.float32))
    smallT = smallT.at[:100, 3].set(b2.reshape(-1).astype(jnp.float32))
    smallT = smallT.at[:OUT_DIM, 4].set(b3.reshape(-1).astype(jnp.float32))

    w2t = jnp.zeros((H, H1), jnp.float32).at[:100, :60].set(
        w2.T.astype(jnp.float32))
    w3t = jnp.zeros((OUT_PAD, H), jnp.float32).at[:OUT_DIM, :100].set(
        w3.T.astype(jnp.float32))

    wdt = jnp.bfloat16 if use_bf16 else jnp.float32
    return smallT, w2t.astype(wdt), w3t.astype(wdt)


def _choose_tb(batch, block_b):
    tb = _round_up(min(block_b, max(batch, 1)), H)       # lane dim multiple of 128
    if batch > H:
        # Keep >=2 grid steps when the batch allows it so both v7x TensorCores
        # get work on the "parallel" batch axis; no-op for small batches.
        half = _round_up((batch + 1) // 2, H)
        tb = min(tb, half)
    return max(tb, H)


def panda_mapper_forward(x, smallT, w2t, w3t, *, block_b=4096):
    """x: (B, 2) float. Returns (B, 7) f32."""
    B = x.shape[0]
    TB = _choose_tb(B, block_b)
    Bp = _round_up(B, TB)

    # Lane-dense transposed input slab (2, Bp); padded batch columns are zero.
    x_t = jnp.pad(x.astype(jnp.float32).T, ((0, 0), (0, Bp - B)))

    grid_spec = pltpu.PrefetchScalarGridSpec(
        num_scalar_prefetch=0,
        grid=(Bp // TB,),
        in_specs=[
            pl.BlockSpec((2, TB), lambda i: (0, i)),            # streamed batch tile
            # Resident parameters (constant index_maps, fetched once).
            # TODO(synk): add pipeline_mode=pl.Buffered(1) to these three specs
            # once single-buffering is verified on the deployed jax version;
            # saves ~100 KB of redundant double-buffer VMEM (perf-neutral here).
            pl.BlockSpec((H, N_SMALL_COLS), lambda i: (0, 0)),
            pl.BlockSpec((H, H1), lambda i: (0, 0)),
            pl.BlockSpec((OUT_PAD, H), lambda i: (0, 0)),
        ],
        out_specs=pl.BlockSpec((OUT_PAD, TB), lambda i: (0, i)),
    )

    out_t = pl.pallas_call(
        mapper_kernel,
        out_shape=jax.ShapeDtypeStruct((OUT_PAD, Bp), jnp.float32),
        grid_spec=grid_spec,
        compiler_params=pltpu.CompilerParams(
            dimension_semantics=("parallel",),      # 2-TC sharding on v7x
            vmem_limit_bytes=32 * 1024 * 1024),     # covers v5e's 16 MiB default
    )(x_t, smallT, w2t, w3t)

    # Wrapper-side layout plumbing only: drop the zero pad row, transpose back.
    return out_t[:OUT_DIM, :B].T


def init_linear(key, fan_in, fan_out):
    """Matches nn.Linear's U(-1/sqrt(fan_in), 1/sqrt(fan_in)) init.
    Returns weight transposed to (fan_in, fan_out) and bias (fan_out,)."""
    kw, kb = jax.random.split(key)
    bound = 1.0 / jnp.sqrt(jnp.float32(fan_in))
    w = jax.random.uniform(kw, (fan_in, fan_out), jnp.float32, -bound, bound)
    b = jax.random.uniform(kb, (fan_out,), jnp.float32, -bound, bound)
    return w, b


if __name__ == "__main__":
    root = jax.random.PRNGKey(0)
    k_x, k1, k2, k3 = jax.random.split(root, 4)

    w1, b1 = init_linear(k1, 2, 60)
    w2, b2 = init_linear(k2, 60, 100)
    w3, b3 = init_linear(k3, 100, 7)

    use_bf16 = _default_use_bf16()
    smallT, w2t, w3t = pack_params(w1, b1, w2, b2, w3, b3, use_bf16=use_bf16)

    def ref_fn(xx):
        # Pure-JAX f32 reference (matches the PyTorch module semantics).
        return jnp.tanh(jnp.tanh(jnp.tanh(xx @ w1 + b1) @ w2 + b2) @ w3 + b3)

    # f32 path (precision=HIGHEST) must match tightly; the bf16 weight +
    # bf16-tanh path gets a quantization tolerance (outputs are tanh-bounded).
    atol = 1e-1 if use_bf16 else 1e-4

    # Small demo batch (single grid step; exercises batch padding 8 -> 128).
    B = 8
    x = jax.random.normal(k_x, (B, 2), jnp.float32)
    out = jax.block_until_ready(panda_mapper_forward(x, smallT, w2t, w3t))
    assert out.shape == (B, OUT_DIM)
    assert jnp.allclose(out, ref_fn(x), atol=atol, rtol=atol), float(
        jnp.max(jnp.abs(out - ref_fn(x))))

    # Multi-step grid (3 streamed tiles) to exercise the pipelined path.
    B2 = 384
    x2 = jax.random.normal(jax.random.PRNGKey(1), (B2, 2), jnp.float32)
    out2 = jax.block_until_ready(
        panda_mapper_forward(x2, smallT, w2t, w3t, block_b=128))
    assert out2.shape == (B2, OUT_DIM)
    assert jnp.allclose(out2, ref_fn(x2), atol=atol, rtol=atol), float(
        jnp.max(jnp.abs(out2 - ref_fn(x2))))

    print("KERNEL_OK")
</pallas_src>

<mosaic_0001>
module attributes {stable_mosaic.version = 11 : i64} {
  func.func @mapper_kernel(%arg0: i32, %arg1: memref<2x128xf32, #tpu.memory_space<vmem>>, %arg2: memref<128x8xf32, #tpu.memory_space<vmem>>, %arg3: memref<128x64xf32, #tpu.memory_space<vmem>>, %arg4: memref<8x128xf32, #tpu.memory_space<vmem>>, %arg5: memref<8x128xf32, #tpu.memory_space<vmem>>) attributes {dimension_semantics = [#tpu.dimension_semantics<parallel>], iteration_bounds = array<i64: 1>, scalar_prefetch = 0 : i64, scratch_operands = 0 : i64, tpu.core_type = #tpu.core_type<tc>, window_params = [{transform_indices = @transform_0, window_bounds = array<i64: 2, 128>}, {pipeline_mode = #tpu.pipeline_mode<synchronous>, transform_indices = @transform_1, window_bounds = array<i64: 128, 8>}, {pipeline_mode = #tpu.pipeline_mode<synchronous>, transform_indices = @transform_2, window_bounds = array<i64: 128, 64>}, {pipeline_mode = #tpu.pipeline_mode<synchronous>, transform_indices = @transform_3, window_bounds = array<i64: 8, 128>}, {transform_indices = @transform_4, window_bounds = array<i64: 8, 128>}]} {
    %c0 = arith.constant 0 : index
    %c0_0 = arith.constant 0 : index
    %0 = vector.load %arg1[%c0, %c0_0] : memref<2x128xf32, #tpu.memory_space<vmem>>, vector<2x128xf32>
    %1 = vector.extract_strided_slice %0 {offsets = [0, 0], sizes = [1, 128], strides = [1, 1]} : vector<2x128xf32> to vector<1x128xf32>
    %2 = vector.extract_strided_slice %0 {offsets = [1, 0], sizes = [1, 128], strides = [1, 1]} : vector<2x128xf32> to vector<1x128xf32>
    %c0_1 = arith.constant 0 : index
    %c0_2 = arith.constant 0 : index
    %3 = vector.load %arg2[%c0_1, %c0_2] : memref<128x8xf32, #tpu.memory_space<vmem>>, vector<64x1xf32>
    %c0_3 = arith.constant 0 : index
    %c1 = arith.constant 1 : index
    %4 = vector.load %arg2[%c0_3, %c1] : memref<128x8xf32, #tpu.memory_space<vmem>>, vector<64x1xf32>
    %c0_4 = arith.constant 0 : index
    %c2 = arith.constant 2 : index
    %5 = vector.load %arg2[%c0_4, %c2] : memref<128x8xf32, #tpu.memory_space<vmem>>, vector<64x1xf32>
    %c0_5 = arith.constant 0 : index
    %c3 = arith.constant 3 : index
    %6 = vector.load %arg2[%c0_5, %c3] : memref<128x8xf32, #tpu.memory_space<vmem>>, vector<128x1xf32>
    %c0_6 = arith.constant 0 : index
    %c4 = arith.constant 4 : index
    %7 = vector.load %arg2[%c0_6, %c4] : memref<128x8xf32, #tpu.memory_space<vmem>>, vector<8x1xf32>
    %8 = vector.broadcast %3 : vector<64x1xf32> to vector<64x128xf32>
    %9 = vector.broadcast %1 : vector<1x128xf32> to vector<64x128xf32>
    %10 = arith.mulf %8, %9 : vector<64x128xf32>
    %11 = vector.broadcast %4 : vector<64x1xf32> to vector<64x128xf32>
    %12 = vector.broadcast %2 : vector<1x128xf32> to vector<64x128xf32>
    %13 = arith.mulf %11, %12 : vector<64x128xf32>
    %14 = arith.addf %10, %13 : vector<64x128xf32>
    %15 = vector.broadcast %5 : vector<64x1xf32> to vector<64x128xf32>
    %16 = arith.addf %14, %15 : vector<64x128xf32>
    %17 = math.tanh %16 : vector<64x128xf32>
    %c0_7 = arith.constant 0 : index
    %c0_8 = arith.constant 0 : index
    %18 = vector.load %arg3[%c0_7, %c0_8] : memref<128x64xf32, #tpu.memory_space<vmem>>, vector<128x64xf32>
    %cst = arith.constant dense<0.000000e+00> : vector<128x128xf32>
    %19 = tpu.matmul %18, %17, %cst {dimension_numbers = #tpu.dot_dimension_numbers<[1], [0], [0], [1], [0, 0, 1, 1], [], []>, precision = #tpu.contract_precision<fp32>} : vector<128x64xf32>, vector<64x128xf32>, vector<128x128xf32> -> vector<128x128xf32>
    %20 = vector.broadcast %6 : vector<128x1xf32> to vector<128x128xf32>
    %21 = arith.addf %19, %20 : vector<128x128xf32>
    %22 = math.tanh %21 : vector<128x128xf32>
    %c0_9 = arith.constant 0 : index
    %c0_10 = arith.constant 0 : index
    %23 = vector.load %arg4[%c0_9, %c0_10] : memref<8x128xf32, #tpu.memory_space<vmem>>, vector<8x128xf32>
    %cst_11 = arith.constant dense<0.000000e+00> : vector<8x128xf32>
    %24 = tpu.matmul %23, %22, %cst_11 {dimension_numbers = #tpu.dot_dimension_numbers<[1], [0], [0], [1], [0, 0, 1, 1], [], []>, precision = #tpu.contract_precision<fp32>} : vector<8x128xf32>, vector<128x128xf32>, vector<8x128xf32> -> vector<8x128xf32>
    %25 = vector.broadcast %7 : vector<8x1xf32> to vector<8x128xf32>
    %26 = arith.addf %24, %25 : vector<8x128xf32>
    %27 = math.tanh %26 : vector<8x128xf32>
    %c0_12 = arith.constant 0 : index
    %c0_13 = arith.constant 0 : index
    %28 = vector.load %arg5[%c0_12, %c0_13] : memref<8x128xf32, #tpu.memory_space<vmem>>, vector<8x128xf32>
    tpu.vector_store %arg5[%c0_12, %c0_13], %27 {strides = array<i32>} : memref<8x128xf32, #tpu.memory_space<vmem>>, vector<8x128xf32>,
    return
  }
  func.func @transform_0(%arg0: i32) -> (i32, i32) {
    %c0_i32 = arith.constant 0 : i32
    %c0_i32_0 = arith.constant 0 : i32
    return %c0_i32, %arg0 : i32, i32
  }
  func.func @transform_1(%arg0: i32) -> (i32, i32) {
    %c0_i32 = arith.constant 0 : i32
    %c0_i32_0 = arith.constant 0 : i32
    %c0_i32_1 = arith.constant 0 : i32
    return %c0_i32, %c0_i32_0 : i32, i32
  }
  func.func @transform_2(%arg0: i32) -> (i32, i32) {
    %c0_i32 = arith.constant 0 : i32
    %c0_i32_0 = arith.constant 0 : i32
    %c0_i32_1 = arith.constant 0 : i32
    return %c0_i32, %c0_i32_0 : i32, i32
  }
  func.func @transform_3(%arg0: i32) -> (i32, i32) {
    %c0_i32 = arith.constant 0 : i32
    %c0_i32_0 = arith.constant 0 : i32
    %c0_i32_1 = arith.constant 0 : i32
    return %c0_i32, %c0_i32_0 : i32, i32
  }
  func.func @transform_4(%arg0: i32) -> (i32, i32) {
    %c0_i32 = arith.constant 0 : i32
    %c0_i32_0 = arith.constant 0 : i32
    return %c0_i32, %arg0 : i32, i32
  }
}

</mosaic_0001>

<llo_original>
// kernel: tpu_custom_call.1
$region0: #{tpu_custom_call.1}
  #allocation0 [shape = 'u32[]', space=smem, size = 0x4, offset = 0x4, fixed_abs, tag = 'smem constant byte address 0x4 - core index']
  #allocation1 [shape = 'u32[144,128]{1,0:T(1,128)}', space=vmem, size = 0x12000, scoped, tag = 'internal scratch']
  %s0 = inlined_call_operand.vmem [shape: f32[2,128], index: 0, kind: input, shape index: {}]
  %s1 = inlined_call_operand.vmem [shape: f32[128,8], index: 1, kind: input, shape index: {}]
  %s2 = inlined_call_operand.vmem [shape: f32[128,64], index: 2, kind: input, shape index: {}]
  %s3 = inlined_call_operand.vmem [shape: f32[8,128], index: 3, kind: input, shape index: {}]
  %s4 = inlined_call_operand.hbm [shape: f32[8,128], index: 4, kind: output, shape index: {}]
  %s5 = sld [smem:[#allocation0]]
  $region26: #{tpu_custom_call.1} parent=0
    _
  %s7 = ssub.s32 1, %s5
  %s8 = scalar_select 0, %s7, %s5
  $region1: #{tpu_custom_call.1} parent=0
    #allocation2 [shape = 'u8[4096]{0}', space=vmem, size = 0x1000, scoped, tag = 'output window, operand 0, single buffered']
    #allocation3 [shape = 's32[1]{0}', space=sflag, size = 0x4, scoped, tag = 'scoped memory for tpu_custom_call.1']
    %9 = vsyncpa [#allocation3], 0
    // Predicated region
    $region2: #{tpu_custom_call.1} parent=1 // pred_check
      _
    $region3: #{tpu_custom_call.1} parent=1 // pred_check_branch
      %11 = sbr.rel (0) target = $region5
    $region4: #{tpu_custom_call.1} parent=1 // pred_region
      _
    $region5: #{tpu_custom_call.1} parent=1 // pred_fallthru
      _
    // Predicated region
    $region6: #{tpu_custom_call.1} parent=1 // pred_check
      _
    $region7: #{tpu_custom_call.1} parent=1 // pred_check_branch
      %13 = sbr.rel (0) target = $region9
    $region8: #{tpu_custom_call.1} parent=1 // pred_region
      _
    $region9: #{tpu_custom_call.1} parent=1 // pred_fallthru
      _
    // Predicated region
    $region10: #{tpu_custom_call.1} parent=1 // pred_check
      _
    $region11: #{tpu_custom_call.1} parent=1 // pred_check_branch
      %15 = sbr.rel (0) target = $region13
    $region12: #{tpu_custom_call.1} parent=1 // pred_region
      _
    $region13: #{tpu_custom_call.1} parent=1 // pred_fallthru
      _
    // Predicated region
    $region14: #{tpu_custom_call.1} parent=1 // pred_check
      _
    $region15: #{tpu_custom_call.1} parent=1 // pred_check_branch
      %17 = sbr.rel (0) target = $region17
    $region16: #{tpu_custom_call.1} parent=1 // pred_region
      _
    $region17: #{tpu_custom_call.1} parent=1 // pred_fallthru
      _
    %v18 = vld [vmem:[%s0] sm:$0x3]
    %v19 = vld [vmem:[%s1] sm:$0xff]
    %v20 = vld [vmem:[%s1 + $0x8] sm:$0xff]
    %v21 = vld [vmem:[%s1 + $0x10] sm:$0xff]
    %v22 = vld [vmem:[%s1 + $0x18] sm:$0xff]
    %v23 = vld [vmem:[%s1 + $0x20] sm:$0xff]
    %v24 = vld [vmem:[%s1 + $0x28] sm:$0xff]
    %v25 = vld [vmem:[%s1 + $0x30] sm:$0xff]
    %v26 = vld [vmem:[%s1 + $0x38] sm:$0xff]
    %v27 = vld [vmem:[%s1 + $0x40] sm:$0xff]
    %v28 = vld [vmem:[%s1 + $0x48] sm:$0xff]
    %v29 = vld [vmem:[%s1 + $0x50] sm:$0xff]
    %v30 = vld [vmem:[%s1 + $0x58] sm:$0xff]
    %v31 = vld [vmem:[%s1 + $0x60] sm:$0xff]
    %v32 = vld [vmem:[%s1 + $0x68] sm:$0xff]
    %v33 = vld [vmem:[%s1 + $0x70] sm:$0xff]
    %v34 = vld [vmem:[%s1 + $0x78] sm:$0xff]
    %36 = vset.pattern.permute.xlu0 0
    %37 = vperm.xlu0 %36, %v19
    %v38 = vpop.permute.xlu0 %37
    %41 = vset.pattern.permute.xlu0 0
    %42 = vperm.xlu0 %41, %v20
    %v43 = vpop.permute.xlu0 %42
    %46 = vset.pattern.permute.xlu0 0
    %47 = vperm.xlu0 %46, %v21
    %v48 = vpop.permute.xlu0 %47
    %51 = vset.pattern.permute.xlu0 0
    %52 = vperm.xlu0 %51, %v22
    %v53 = vpop.permute.xlu0 %52
    %56 = vset.pattern.permute.xlu0 0
    %57 = vperm.xlu0 %56, %v23
    %v58 = vpop.permute.xlu0 %57
    %61 = vset.pattern.permute.xlu0 0
    %62 = vperm.xlu0 %61, %v24
    %v63 = vpop.permute.xlu0 %62
    %66 = vset.pattern.permute.xlu0 0
    %67 = vperm.xlu0 %66, %v25
    %v68 = vpop.permute.xlu0 %67
    %71 = vset.pattern.permute.xlu0 0
    %72 = vperm.xlu0 %71, %v26
    %v73 = vpop.permute.xlu0 %72
    %v75 = vlaneseq
    %v76 = vshrl.u32 %v75, 7
    %v77 = vsub.s32 0, %v76
    %v78 = vrot.slane %v18, %v77
    %v79 = vmul.f32 %v38, %v78
    %v80 = vmul.f32 %v43, %v78
    %v81 = vmul.f32 %v48, %v78
    %v82 = vmul.f32 %v53, %v78
    %v83 = vmul.f32 %v58, %v78
    %v84 = vmul.f32 %v63, %v78
    %v85 = vmul.f32 %v68, %v78
    %v86 = vmul.f32 %v73, %v78
    %87 = vset.pattern.permute.xlu0 1
    %88 = vperm.xlu0 %87, %v19
    %v89 = vpop.permute.xlu0 %88
    %91 = vset.pattern.permute.xlu0 1
    %92 = vperm.xlu0 %91, %v20
    %v93 = vpop.permute.xlu0 %92
    %95 = vset.pattern.permute.xlu0 1
    %96 = vperm.xlu0 %95, %v21
    %v97 = vpop.permute.xlu0 %96
    %99 = vset.pattern.permute.xlu0 1
    %100 = vperm.xlu0 %99, %v22
    %v101 = vpop.permute.xlu0 %100
    %103 = vset.pattern.permute.xlu0 1
    %104 = vperm.xlu0 %103, %v23
    %v105 = vpop.permute.xlu0 %104
    %107 = vset.pattern.permute.xlu0 1
    %108 = vperm.xlu0 %107, %v24
    %v109 = vpop.permute.xlu0 %108
    %111 = vset.pattern.permute.xlu0 1
    %112 = vperm.xlu0 %111, %v25
    %v113 = vpop.permute.xlu0 %112
    %115 = vset.pattern.permute.xlu0 1
    %116 = vperm.xlu0 %115, %v26
    %v117 = vpop.permute.xlu0 %116
    %v119 = vlaneseq
    %v120 = vshrl.u32 %v119, 7
    %v121 = vsub.s32 1, %v120
    %v122 = vrot.slane %v18, %v121
    %v123 = vmul.f32 %v89, %v122
    %v124 = vmul.f32 %v93, %v122
    %v125 = vmul.f32 %v97, %v122
    %v126 = vmul.f32 %v101, %v122
    %v127 = vmul.f32 %v105, %v122
    %v128 = vmul.f32 %v109, %v122
    %v129 = vmul.f32 %v113, %v122
    %v130 = vmul.f32 %v117, %v122
    %v131 = vadd.f32 %v79, %v123
    %v132 = vadd.f32 %v80, %v124
    %v133 = vadd.f32 %v81, %v125
    %v134 = vadd.f32 %v82, %v126
    %v135 = vadd.f32 %v83, %v127
    %v136 = vadd.f32 %v84, %v128
    %v137 = vadd.f32 %v85, %v129
    %v138 = vadd.f32 %v86, %v130
    %139 = vset.pattern.permute.xlu0 2
    %140 = vperm.xlu0 %139, %v19
    %v141 = vpop.permute.xlu0 %140
    %143 = vset.pattern.permute.xlu0 2
    %144 = vperm.xlu0 %143, %v20
    %v145 = vpop.permute.xlu0 %144
    %147 = vset.pattern.permute.xlu0 2
    %148 = vperm.xlu0 %147, %v21
    %v149 = vpop.permute.xlu0 %148
    %151 = vset.pattern.permute.xlu0 2
    %152 = vperm.xlu0 %151, %v22
    %v153 = vpop.permute.xlu0 %152
    %155 = vset.pattern.permute.xlu0 2
    %156 = vperm.xlu0 %155, %v23
    %v157 = vpop.permute.xlu0 %156
    %159 = vset.pattern.permute.xlu0 2
    %160 = vperm.xlu0 %159, %v24
    %v161 = vpop.permute.xlu0 %160
    %163 = vset.pattern.permute.xlu0 2
    %164 = vperm.xlu0 %163, %v25
    %v165 = vpop.permute.xlu0 %164
    %167 = vset.pattern.permute.xlu0 2
    %168 = vperm.xlu0 %167, %v26
    %v169 = vpop.permute.xlu0 %168
    %v171 = vadd.f32 %v131, %v141
    %v172 = vadd.f32 %v132, %v145
    %v173 = vadd.f32 %v133, %v149
    %v174 = vadd.f32 %v134, %v153
    %v175 = vadd.f32 %v135, %v157
    %v176 = vadd.f32 %v136, %v161
    %v177 = vadd.f32 %v137, %v165
    %v178 = vadd.f32 %v138, %v169
    %v179 = vtanh.pop %v171
    %v180 = vtanh.pop %v172
    %v181 = vtanh.pop %v173
    %v182 = vtanh.pop %v174
    %v183 = vtanh.pop %v175
    %v184 = vtanh.pop %v176
    %v185 = vtanh.pop %v177
    %v186 = vtanh.pop %v178
    %v187 = vld [vmem:[%s2] sm:$0xff]
    %v188 = vld [vmem:[%s2 + $0x8] sm:$0xff]
    %v189 = vld [vmem:[%s2 + $0x10] sm:$0xff]
    %v190 = vld [vmem:[%s2 + $0x18] sm:$0xff]
    %v191 = vld [vmem:[%s2 + $0x20] sm:$0xff]
    %v192 = vld [vmem:[%s2 + $0x28] sm:$0xff]
    %v193 = vld [vmem:[%s2 + $0x30] sm:$0xff]
    %v194 = vld [vmem:[%s2 + $0x38] sm:$0xff]
    %v195 = vld [vmem:[%s2 + $0x40] sm:$0xff]
    %v196 = vld [vmem:[%s2 + $0x48] sm:$0xff]
    %v197 = vld [vmem:[%s2 + $0x50] sm:$0xff]
    %v198 = vld [vmem:[%s2 + $0x58] sm:$0xff]
    %v199 = vld [vmem:[%s2 + $0x60] sm:$0xff]
    %v200 = vld [vmem:[%s2 + $0x68] sm:$0xff]
    %v201 = vld [vmem:[%s2 + $0x70] sm:$0xff]
    %v202 = vld [vmem:[%s2 + $0x78] sm:$0xff]
    %203 = vset.pattern.permute.xlu0 3
    %204 = vperm.xlu0 %203, %v19
    %v205 = vpop.permute.xlu0 %204
    %207 = vset.pattern.permute.xlu0 3
    %208 = vperm.xlu0 %207, %v20
    %v209 = vpop.permute.xlu0 %208
    %211 = vset.pattern.permute.xlu0 3
    %212 = vperm.xlu0 %211, %v21
    %v213 = vpop.permute.xlu0 %212
    %215 = vset.pattern.permute.xlu0 3
    %216 = vperm.xlu0 %215, %v22
    %v217 = vpop.permute.xlu0 %216
    %219 = vset.pattern.permute.xlu0 3
    %220 = vperm.xlu0 %219, %v23
    %v221 = vpop.permute.xlu0 %220
    %223 = vset.pattern.permute.xlu0 3
    %224 = vperm.xlu0 %223, %v24
    %v225 = vpop.permute.xlu0 %224
    %227 = vset.pattern.permute.xlu0 3
    %228 = vperm.xlu0 %227, %v25
    %v229 = vpop.permute.xlu0 %228
    %231 = vset.pattern.permute.xlu0 3
    %232 = vperm.xlu0 %231, %v26
    %v233 = vpop.permute.xlu0 %232
    %236 = vset.pattern.permute.xlu0 3
    %237 = vperm.xlu0 %236, %v27
    %v238 = vpop.permute.xlu0 %237
    %241 = vset.pattern.permute.xlu0 3
    %242 = vperm.xlu0 %241, %v28
    %v243 = vpop.permute.xlu0 %242
    %246 = vset.pattern.permute.xlu0 3
    %247 = vperm.xlu0 %246, %v29
    %v248 = vpop.permute.xlu0 %247
    %251 = vset.pattern.permute.xlu0 3
    %252 = vperm.xlu0 %251, %v30
    %v253 = vpop.permute.xlu0 %252
    %256 = vset.pattern.permute.xlu0 3
    %257 = vperm.xlu0 %256, %v31
    %v258 = vpop.permute.xlu0 %257
    %261 = vset.pattern.permute.xlu0 3
    %262 = vperm.xlu0 %261, %v32
    %v263 = vpop.permute.xlu0 %262
    %266 = vset.pattern.permute.xlu0 3
    %267 = vperm.xlu0 %266, %v33
    %v268 = vpop.permute.xlu0 %267
    %271 = vset.pattern.permute.xlu0 3
    %272 = vperm.xlu0 %271, %v34
    %v273 = vpop.permute.xlu0 %272
    %vm275 = vcmask 523264
    %v277 = vsel %vm275, %v187, 0
    %v280 = vsel %vm275, %v188, 0
    %v283 = vsel %vm275, %v189, 0
    %v286 = vsel %vm275, %v190, 0
    %v289 = vsel %vm275, %v191, 0
    %v292 = vsel %vm275, %v192, 0
    %v295 = vsel %vm275, %v193, 0
    %v298 = vsel %vm275, %v194, 0
    %v301 = vsel %vm275, %v195, 0
    %v304 = vsel %vm275, %v196, 0
    %v307 = vsel %vm275, %v197, 0
    %v310 = vsel %vm275, %v198, 0
    %v313 = vsel %vm275, %v199, 0
    %v316 = vsel %vm275, %v200, 0
    %v319 = vsel %vm275, %v201, 0
    %v322 = vsel %vm275, %v202, 0
    %324 = vmatprep.subr.mxu0 0.0
    %v325 = vand.u32 %v179, 4294901760
    %326 = vmatpush1.msra.mxu0 %v325
    %327 = vmatprep.subr.mxu0 0.0
    %v328 = vand.u32 %v180, 4294901760
    %329 = vmatpush1.msra.mxu0 %v328
    %330 = vmatprep.subr.mxu0 0.0
    %v331 = vand.u32 %v181, 4294901760
    %332 = vmatpush1.msra.mxu0 %v331
    %333 = vmatprep.subr.mxu0 0.0
    %v334 = vand.u32 %v182, 4294901760
    %335 = vmatpush1.msra.mxu0 %v334
    %336 = vmatprep.subr.mxu0 0.0
    %v337 = vand.u32 %v183, 4294901760
    %338 = vmatpush1.msra.mxu0 %v337
    %339 = vmatprep.subr.mxu0 0.0
    %v340 = vand.u32 %v184, 4294901760
    %341 = vmatpush1.msra.mxu0 %v340
    %342 = vmatprep.subr.mxu0 0.0
    %v343 = vand.u32 %v185, 4294901760
    %344 = vmatpush1.msra.mxu0 %v343
    %345 = vmatprep.subr.mxu0 0.0
    %v346 = vand.u32 %v186, 4294901760
    %347 = vmatpush1.msra.mxu0 %v346
    %348 = vmatprep.subr.mxu0 0.0
    %349 = vmatpush1.msra.mxu0 0.0
    %350 = vmatprep.subr.mxu0 0.0
    %351 = vmatpush1.msra.mxu0 0.0
    %352 = vmatprep.subr.mxu0 0.0
    %353 = vmatpush1.msra.mxu0 0.0
    %354 = vmatprep.subr.mxu0 0.0
    %355 = vmatpush1.msra.mxu0 0.0
    %356 = vmatprep.subr.mxu0 0.0
    %357 = vmatpush1.msra.mxu0 0.0
    %358 = vmatprep.subr.mxu0 0.0
    %359 = vmatpush1.msra.mxu0 0.0
    %360 = vmatprep.subr.mxu0 0.0
    %361 = vmatpush1.msra.mxu0 0.0
    %362 = vmatprep.subr.mxu0 0.0
    %363 = vmatpush1.msra.mxu0 0.0
    %364 = vmatprep.subr.mxu0 0.0
    %365 = vmatpush1.msra.mxu0 0.0
    %366 = vmatprep.subr.mxu0 0.0
    %367 = vmatpush1.msra.mxu0 0.0
    %368 = vmatprep.subr.mxu0 0.0
    %369 = vmatpush1.msra.mxu0 0.0
    %370 = vmatprep.subr.mxu0 0.0
    %371 = vmatpush1.msra.mxu0 0.0
    %372 = vmatprep.subr.mxu0 0.0
    %373 = vmatpush1.msra.mxu0 0.0
    %374 = vmatprep.subr.mxu0 0.0
    %375 = vmatpush1.msra.mxu0 0.0
    %376 = vmatprep.subr.mxu0 0.0
    %377 = vmatpush1.msra.mxu0 0.0
    %378 = vmatprep.subr.mxu0 0.0
    %379 = vmatpush1.msra.mxu0 0.0
    %380 = vmatprep.subr.mxu0 0.0
    %381 = vmatpush1.msra.mxu0 0.0
    %382 = vmatprep.subr.mxu0 0.0
    %383 = vmatpush1.msra.mxu0 0.0
    %384 = vmatprep.subr.mxu0 0.0
    %385 = vmatpush1.msra.mxu0 0.0
    %386 = vmatprep.subr.mxu0 0.0
    %387 = vmatpush1.msra.mxu0 0.0
    %388 = vmatprep.subr.mxu0 0.0
    %389 = vmatpush1.msra.mxu0 0.0
    %390 = vmatprep.subr.mxu0 0.0
    %391 = vmatpush1.msra.mxu0 0.0
    %392 = vmatprep.subr.mxu0 0.0
    %393 = vmatpush1.msra.mxu0 0.0
    %394 = vmatprep.subr.mxu0 0.0
    %395 = vmatpush1.msra.mxu0 0.0
    %396 = vmatprep.mubr.f32.mxu0 0.0
    %v397 = vand.u32 %v277, 4294901760
    %v398 = vsub.f32 %v277, %v397
    %v399 = vand.u32 %v398, 4294901760
    %v400 = vsub.f32 %v398, %v399
    %v401 = vand.u32 %v400, 4294901760
    %402 = vmatmul.mubr.f32.gmra.mrb[0].mxu0 %v401
    %v403 = vpop.f32.mrb[0].mxu0
    %v404 = vadd.f32 %v205, %v403
    %v405 = vpop.f32.mrb[0].mxu0
    %406 = vmatprep.mubr.f32.mxu0 0.0
    %v407 = vand.u32 %v280, 4294901760
    %v408 = vsub.f32 %v280, %v407
    %v409 = vand.u32 %v408, 4294901760
    %v410 = vsub.f32 %v408, %v409
    %v411 = vand.u32 %v410, 4294901760
    %412 = vmatmul.mubr.f32.gmra.mrb[0].mxu0 %v411
    %v413 = vpop.f32.mrb[0].mxu0
    %v414 = vadd.f32 %v209, %v413
    %v415 = vpop.f32.mrb[0].mxu0
    %416 = vmatprep.mubr.f32.mxu0 0.0
    %v417 = vand.u32 %v283, 4294901760
    %v418 = vsub.f32 %v283, %v417
    %v419 = vand.u32 %v418, 4294901760
    %v420 = vsub.f32 %v418, %v419
    %v421 = vand.u32 %v420, 4294901760
    %422 = vmatmul.mubr.f32.gmra.mrb[0].mxu0 %v421
    %v423 = vpop.f32.mrb[0].mxu0
    %v424 = vadd.f32 %v213, %v423
    %v425 = vpop.f32.mrb[0].mxu0
    %426 = vmatprep.mubr.f32.mxu0 0.0
    %v427 = vand.u32 %v286, 4294901760
    %v428 = vsub.f32 %v286, %v427
    %v429 = vand.u32 %v428, 4294901760
    %v430 = vsub.f32 %v428, %v429
    %v431 = vand.u32 %v430, 4294901760
    %432 = vmatmul.mubr.f32.gmra.mrb[0].mxu0 %v431
    %v433 = vpop.f32.mrb[0].mxu0
    %v434 = vadd.f32 %v217, %v433
    %v435 = vpop.f32.mrb[0].mxu0
    %436 = vmatprep.mubr.f32.mxu0 0.0
    %v437 = vand.u32 %v289, 4294901760
    %v438 = vsub.f32 %v289, %v437
    %v439 = vand.u32 %v438, 4294901760
    %v440 = vsub.f32 %v438, %v439
    %v441 = vand.u32 %v440, 4294901760
    %442 = vmatmul.mubr.f32.gmra.mrb[0].mxu0 %v441
    %v443 = vpop.f32.mrb[0].mxu0
    %v444 = vadd.f32 %v221, %v443
    %v445 = vpop.f32.mrb[0].mxu0
    %446 = vmatprep.mubr.f32.mxu0 0.0
    %v447 = vand.u32 %v292, 4294901760
    %v448 = vsub.f32 %v292, %v447
    %v449 = vand.u32 %v448, 4294901760
    %v450 = vsub.f32 %v448, %v449
    %v451 = vand.u32 %v450, 4294901760
    %452 = vmatmul.mubr.f32.gmra.mrb[0].mxu0 %v451
    %v453 = vpop.f32.mrb[0].mxu0
    %v454 = vadd.f32 %v225, %v453
    %v455 = vpop.f32.mrb[0].mxu0
    %456 = vmatprep.mubr.f32.mxu0 0.0
    %v457 = vand.u32 %v295, 4294901760
    %v458 = vsub.f32 %v295, %v457
    %v459 = vand.u32 %v458, 4294901760
    %v460 = vsub.f32 %v458, %v459
    %v461 = vand.u32 %v460, 4294901760
    %462 = vmatmul.mubr.f32.gmra.mrb[0].mxu0 %v461
    %v463 = vpop.f32.mrb[0].mxu0
    %v464 = vadd.f32 %v229, %v463
    %v465 = vpop.f32.mrb[0].mxu0
    %466 = vmatprep.mubr.f32.mxu0 0.0
    %v467 = vand.u32 %v298, 4294901760
    %v468 = vsub.f32 %v298, %v467
    %v469 = vand.u32 %v468, 4294901760
    %v470 = vsub.f32 %v468, %v469
    %v471 = vand.u32 %v470, 4294901760
    %472 = vmatmul.mubr.f32.gmra.mrb[0].mxu0 %v471
    %v473 = vpop.f32.mrb[0].mxu0
    %v474 = vadd.f32 %v233, %v473
    %v475 = vpop.f32.mrb[0].mxu0
    %476 = vmatprep.mubr.f32.mxu0 0.0
    %v477 = vand.u32 %v301, 4294901760
    %v478 = vsub.f32 %v301, %v477
    %v479 = vand.u32 %v478, 4294901760
    %v480 = vsub.f32 %v478, %v479
    %v481 = vand.u32 %v480, 4294901760
    %482 = vmatmul.mubr.f32.gmra.mrb[0].mxu0 %v481
    %v483 = vpop.f32.mrb[0].mxu0
    %v484 = vadd.f32 %v238, %v483
    %v485 = vpop.f32.mrb[0].mxu0
    %486 = vmatprep.mubr.f32.mxu0 0.0
    %v487 = vand.u32 %v304, 4294901760
    %v488 = vsub.f32 %v304, %v487
    %v489 = vand.u32 %v488, 4294901760
    %v490 = vsub.f32 %v488, %v489
    %v491 = vand.u32 %v490, 4294901760
    %492 = vmatmul.mubr.f32.gmra.mrb[0].mxu0 %v491
    %v493 = vpop.f32.mrb[0].mxu0
    %v494 = vadd.f32 %v243, %v493
    %v495 = vpop.f32.mrb[0].mxu0
    %496 = vmatprep.mubr.f32.mxu0 0.0
    %v497 = vand.u32 %v307, 4294901760
    %v498 = vsub.f32 %v307, %v497
    %v499 = vand.u32 %v498, 4294901760
    %v500 = vsub.f32 %v498, %v499
    %v501 = vand.u32 %v500, 4294901760
    %502 = vmatmul.mubr.f32.gmra.mrb[0].mxu0 %v501
    %v503 = vpop.f32.mrb[0].mxu0
    %v504 = vadd.f32 %v248, %v503
    %v505 = vpop.f32.mrb[0].mxu0
    %506 = vmatprep.mubr.f32.mxu0 0.0
    %v507 = vand.u32 %v310, 4294901760
    %v508 = vsub.f32 %v310, %v507
    %v509 = vand.u32 %v508, 4294901760
    %v510 = vsub.f32 %v508, %v509
    %v511 = vand.u32 %v510, 4294901760
    %512 = vmatmul.mubr.f32.gmra.mrb[0].mxu0 %v511
    %v513 = vpop.f32.mrb[0].mxu0
    %v514 = vadd.f32 %v253, %v513
    %v515 = vpop.f32.mrb[0].mxu0
    %516 = vmatprep.mubr.f32.mxu0 0.0
    %v517 = vand.u32 %v313, 4294901760
    %v518 = vsub.f32 %v313, %v517
    %v519 = vand.u32 %v518, 4294901760
    %v520 = vsub.f32 %v518, %v519
    %v521 = vand.u32 %v520, 4294901760
    %522 = vmatmul.mubr.f32.gmra.mrb[0].mxu0 %v521
    %v523 = vpop.f32.mrb[0].mxu0
    %v524 = vadd.f32 %v258, %v523
    %v525 = vpop.f32.mrb[0].mxu0
    %526 = vmatprep.mubr.f32.mxu0 0.0
    %v527 = vand.u32 %v316, 4294901760
    %v528 = vsub.f32 %v316, %v527
    %v529 = vand.u32 %v528, 4294901760
    %v530 = vsub.f32 %v528, %v529
    %v531 = vand.u32 %v530, 4294901760
    %532 = vmatmul.mubr.f32.gmra.mrb[0].mxu0 %v531
    %v533 = vpop.f32.mrb[0].mxu0
    %v534 = vadd.f32 %v263, %v533
    %v535 = vpop.f32.mrb[0].mxu0
    %536 = vmatprep.mubr.f32.mxu0 0.0
    %v537 = vand.u32 %v319, 4294901760
    %v538 = vsub.f32 %v319, %v537
    %v539 = vand.u32 %v538, 4294901760
    %v540 = vsub.f32 %v538, %v539
    %v541 = vand.u32 %v540, 4294901760
    %542 = vmatmul.mubr.f32.gmra.mrb[0].mxu0 %v541
    %v543 = vpop.f32.mrb[0].mxu0
    %v544 = vadd.f32 %v268, %v543
    %v545 = vpop.f32.mrb[0].mxu0
    %546 = vmatprep.mubr.f32.mxu0 0.0
    %v547 = vand.u32 %v322, 4294901760
    %v548 = vsub.f32 %v322, %v547
    %v549 = vand.u32 %v548, 4294901760
    %v550 = vsub.f32 %v548, %v549
    %v551 = vand.u32 %v550, 4294901760
    %552 = vmatmul.mubr.f32.gmra.mrb[0].mxu0 %v551
    %v553 = vpop.f32.mrb[0].mxu0
    %v554 = vadd.f32 %v273, %v553
    %v555 = vpop.f32.mrb[0].mxu0
    %556 = vdwg.mxu0
    %557 = vmatprep.subr.mxu0 0.0
    %v558 = vand.u32 %v179, 4294901760
    %v559 = vsub.f32 %v179, %v558
    %v560 = vand.u32 %v559, 4294901760
    %v561 = vsub.f32 %v559, %v560
    %v562 = vand.u32 %v561, 4294901760
    %563 = vmatpush1.msra.mxu0 %v562
    %564 = vmatprep.subr.mxu0 0.0
    %v565 = vand.u32 %v180, 4294901760
    %v566 = vsub.f32 %v180, %v565
    %v567 = vand.u32 %v566, 4294901760
    %v568 = vsub.f32 %v566, %v567
    %v569 = vand.u32 %v568, 4294901760
    %570 = vmatpush1.msra.mxu0 %v569
    %571 = vmatprep.subr.mxu0 0.0
    %v572 = vand.u32 %v181, 4294901760
    %v573 = vsub.f32 %v181, %v572
    %v574 = vand.u32 %v573, 4294901760
    %v575 = vsub.f32 %v573, %v574
    %v576 = vand.u32 %v575, 4294901760
    %577 = vmatpush1.msra.mxu0 %v576
    %578 = vmatprep.subr.mxu0 0.0
    %v579 = vand.u32 %v182, 4294901760
    %v580 = vsub.f32 %v182, %v579
    %v581 = vand.u32 %v580, 4294901760
    %v582 = vsub.f32 %v580, %v581
    %v583 = vand.u32 %v582, 4294901760
    %584 = vmatpush1.msra.mxu0 %v583
    %585 = vmatprep.subr.mxu0 0.0
    %v586 = vand.u32 %v183, 4294901760
    %v587 = vsub.f32 %v183, %v586
    %v588 = vand.u32 %v587, 4294901760
    %v589 = vsub.f32 %v587, %v588
    %v590 = vand.u32 %v589, 4294901760
    %591 = vmatpush1.msra.mxu0 %v590
    %592 = vmatprep.subr.mxu0 0.0
    %v593 = vand.u32 %v184, 4294901760
    %v594 = vsub.f32 %v184, %v593
    %v595 = vand.u32 %v594, 4294901760
    %v596 = vsub.f32 %v594, %v595
    %v597 = vand.u32 %v596, 4294901760
    %598 = vmatpush1.msra.mxu0 %v597
    %599 = vmatprep.subr.mxu0 0.0
    %v600 = vand.u32 %v185, 4294901760
    %v601 = vsub.f32 %v185, %v600
    %v602 = vand.u32 %v601, 4294901760
    %v603 = vsub.f32 %v601, %v602
    %v604 = vand.u32 %v603, 4294901760
    %605 = vmatpush1.msra.mxu0 %v604
    %606 = vmatprep.subr.mxu0 0.0
    %v607 = vand.u32 %v186, 4294901760
    %v608 = vsub.f32 %v186, %v607
    %v609 = vand.u32 %v608, 4294901760
    %v610 = vsub.f32 %v608, %v609
    %v611 = vand.u32 %v610, 4294901760
    %612 = vmatpush1.msra.mxu0 %v611
    %613 = vmatprep.subr.mxu0 0.0
    %614 = vmatpush1.msra.mxu0 0.0
    %615 = vmatprep.subr.mxu0 0.0
    %616 = vmatpush1.msra.mxu0 0.0
    %617 = vmatprep.subr.mxu0 0.0
    %618 = vmatpush1.msra.mxu0 0.0
    %619 = vmatprep.subr.mxu0 0.0
    %620 = vmatpush1.msra.mxu0 0.0
    %621 = vmatprep.subr.mxu0 0.0
    %622 = vmatpush1.msra.mxu0 0.0
    %623 = vmatprep.subr.mxu0 0.0
    %624 = vmatpush1.msra.mxu0 0.0
    %625 = vmatprep.subr.mxu0 0.0
    %626 = vmatpush1.msra.mxu0 0.0
    %627 = vmatprep.subr.mxu0 0.0
    %628 = vmatpush1.msra.mxu0 0.0
    %629 = vmatprep.subr.mxu0 0.0
    %630 = vmatpush1.msra.mxu0 0.0
    %631 = vmatprep.subr.mxu0 0.0
    %632 = vmatpush1.msra.mxu0 0.0
    %633 = vmatprep.subr.mxu0 0.0
    %634 = vmatpush1.msra.mxu0 0.0
    %635 = vmatprep.subr.mxu0 0.0
    %636 = vmatpush1.msra.mxu0 0.0
    %637 = vmatprep.subr.mxu0 0.0
    %638 = vmatpush1.msra.mxu0 0.0
    %639 = vmatprep.subr.mxu0 0.0
    %640 = vmatpush1.msra.mxu0 0.0
    %641 = vmatprep.subr.mxu0 0.0
    %642 = vmatpush1.msra.mxu0 0.0
    %643 = vmatprep.subr.mxu0 0.0
    %644 = vmatpush1.msra.mxu0 0.0
    %645 = vmatprep.subr.mxu0 0.0
    %646 = vmatpush1.msra.mxu0 0.0
    %647 = vmatprep.subr.mxu0 0.0
    %648 = vmatpush1.msra.mxu0 0.0
    %649 = vmatprep.subr.mxu0 0.0
    %650 = vmatpush1.msra.mxu0 0.0
    %651 = vmatprep.subr.mxu0 0.0
    %652 = vmatpush1.msra.mxu0 0.0
    %653 = vmatprep.subr.mxu0 0.0
    %654 = vmatpush1.msra.mxu0 0.0
    %655 = vmatprep.subr.mxu0 0.0
    %656 = vmatpush1.msra.mxu0 0.0
    %657 = vmatprep.subr.mxu0 0.0
    %658 = vmatpush1.msra.mxu0 0.0
    %659 = vmatprep.subr.mxu0 0.0
    %660 = vmatpush1.msra.mxu0 0.0
    %661 = vmatprep.mubr.f32.mxu0 0.0
    %v662 = vand.u32 %v277, 4294901760
    %663 = vmatmul.mubr.f32.gmra.mrb[0].mxu0 %v662
    %v664 = vpop.f32.mrb[0].mxu0
    %v665 = vadd.f32 %v404, %v664
    %v666 = vpop.f32.mrb[0].mxu0
    %667 = vmatprep.mubr.f32.mxu0 0.0
    %v668 = vand.u32 %v280, 4294901760
    %669 = vmatmul.mubr.f32.gmra.mrb[0].mxu0 %v668
    %v670 = vpop.f32.mrb[0].mxu0
    %v671 = vadd.f32 %v414, %v670
    %v672 = vpop.f32.mrb[0].mxu0
    %673 = vmatprep.mubr.f32.mxu0 0.0
    %v674 = vand.u32 %v283, 4294901760
    %675 = vmatmul.mubr.f32.gmra.mrb[0].mxu0 %v674
    %v676 = vpop.f32.mrb[0].mxu0
    %v677 = vadd.f32 %v424, %v676
    %v678 = vpop.f32.mrb[0].mxu0
    %679 = vmatprep.mubr.f32.mxu0 0.0
    %v680 = vand.u32 %v286, 4294901760
    %681 = vmatmul.mubr.f32.gmra.mrb[0].mxu0 %v680
    %v682 = vpop.f32.mrb[0].mxu0
    %v683 = vadd.f32 %v434, %v682
    %v684 = vpop.f32.mrb[0].mxu0
    %685 = vmatprep.mubr.f32.mxu0 0.0
    %v686 = vand.u32 %v289, 4294901760
    %687 = vmatmul.mubr.f32.gmra.mrb[0].mxu0 %v686
    %v688 = vpop.f32.mrb[0].mxu0
    %v689 = vadd.f32 %v444, %v688
    %v690 = vpop.f32.mrb[0].mxu0
    %691 = vmatprep.mubr.f32.mxu0 0.0
    %v692 = vand.u32 %v292, 4294901760
    %693 = vmatmul.mubr.f32.gmra.mrb[0].mxu0 %v692
    %v694 = vpop.f32.mrb[0].mxu0
    %v695 = vadd.f32 %v454, %v694
    %v696 = vpop.f32.mrb[0].mxu0
    %697 = vmatprep.mubr.f32.mxu0 0.0
    %v698 = vand.u32 %v295, 4294901760
    %699 = vmatmul.mubr.f32.gmra.mrb[0].mxu0 %v698
    %v700 = vpop.f32.mrb[0].mxu0
    %v701 = vadd.f32 %v464, %v700
    %v702 = vpop.f32.mrb[0].mxu0
    %703 = vmatprep.mubr.f32.mxu0 0.0
    %v704 = vand.u32 %v298, 4294901760
    %705 = vmatmul.mubr.f32.gmra.mrb[0].mxu0 %v704
    %v706 = vpop.f32.mrb[0].mxu0
    %v707 = vadd.f32 %v474, %v706
    %v708 = vpop.f32.mrb[0].mxu0
    %709 = vmatprep.mubr.f32.mxu0 0.0
    %v710 = vand.u32 %v301, 4294901760
    %711 = vmatmul.mubr.f32.gmra.mrb[0].mxu0 %v710
    %v712 = vpop.f32.mrb[0].mxu0
    %v713 = vadd.f32 %v484, %v712
    %v714 = vpop.f32.mrb[0].mxu0
    %715 = vmatprep.mubr.f32.mxu0 0.0
    %v716 = vand.u32 %v304, 4294901760
    %717 = vmatmul.mubr.f32.gmra.mrb[0].mxu0 %v716
    %v718 = vpop.f32.mrb[0].mxu0
    %v719 = vadd.f32 %v494, %v718
    %v720 = vpop.f32.mrb[0].mxu0
    %721 = vmatprep.mubr.f32.mxu0 0.0
    %v722 = vand.u32 %v307, 4294901760
    %723 = vmatmul.mubr.f32.gmra.mrb[0].mxu0 %v722
    %v724 = vpop.f32.mrb[0].mxu0
    %v725 = vadd.f32 %v504, %v724
    %v726 = vpop.f32.mrb[0].mxu0
    %727 = vmatprep.mubr.f32.mxu0 0.0
    %v728 = vand.u32 %v310, 4294901760
    %729 = vmatmul.mubr.f32.gmra.mrb[0].mxu0 %v728
    %v730 = vpop.f32.mrb[0].mxu0
    %v731 = vadd.f32 %v514, %v730
    %v732 = vpop.f32.mrb[0].mxu0
    %733 = vmatprep.mubr.f32.mxu0 0.0
    %v734 = vand.u32 %v313, 4294901760
    %735 = vmatmul.mubr.f32.gmra.mrb[0].mxu0 %v734
    %v736 = vpop.f32.mrb[0].mxu0
    %v737 = vadd.f32 %v524, %v736
    %v738 = vpop.f32.mrb[0].mxu0
    %739 = vmatprep.mubr.f32.mxu0 0.0
    %v740 = vand.u32 %v316, 4294901760
    %741 = vmatmul.mubr.f32.gmra.mrb[0].mxu0 %v740
    %v742 = vpop.f32.mrb[0].mxu0
    %v743 = vadd.f32 %v534, %v742
    %v744 = vpop.f32.mrb[0].mxu0
    %745 = vmatprep.mubr.f32.mxu0 0.0
    %v746 = vand.u32 %v319, 4294901760
    %747 = vmatmul.mubr.f32.gmra.mrb[0].mxu0 %v746
    %v748 = vpop.f32.mrb[0].mxu0
    %v749 = vadd.f32 %v544, %v748
    %v750 = vpop.f32.mrb[0].mxu0
    %751 = vmatprep.mubr.f32.mxu0 0.0
    %v752 = vand.u32 %v322, 4294901760
    %753 = vmatmul.mubr.f32.gmra.mrb[0].mxu0 %v752
    %v754 = vpop.f32.mrb[0].mxu0
    %v755 = vadd.f32 %v554, %v754
    %v756 = vpop.f32.mrb[0].mxu0
    %757 = vdwg.mxu0
    %758 = vmatprep.subr.mxu0 0.0
    %v759 = vand.u32 %v179, 4294901760
    %v760 = vsub.f32 %v179, %v759
    %761 = vmatpush1.msra.mxu0 %v760
    %762 = vmatprep.subr.mxu0 0.0
    %v763 = vand.u32 %v180, 4294901760
    %v764 = vsub.f32 %v180, %v763
    %765 = vmatpush1.msra.mxu0 %v764
    %766 = vmatprep.subr.mxu0 0.0
    %v767 = vand.u32 %v181, 4294901760
    %v768 = vsub.f32 %v181, %v767
    %769 = vmatpush1.msra.mxu0 %v768
    %770 = vmatprep.subr.mxu0 0.0
    %v771 = vand.u32 %v182, 4294901760
    %v772 = vsub.f32 %v182, %v771
    %773 = vmatpush1.msra.mxu0 %v772
    %774 = vmatprep.subr.mxu0 0.0
    %v775 = vand.u32 %v183, 4294901760
    %v776 = vsub.f32 %v183, %v775
    %777 = vmatpush1.msra.mxu0 %v776
    %778 = vmatprep.subr.mxu0 0.0
    %v779 = vand.u32 %v184, 4294901760
    %v780 = vsub.f32 %v184, %v779
    %781 = vmatpush1.msra.mxu0 %v780
    %782 = vmatprep.subr.mxu0 0.0
    %v783 = vand.u32 %v185, 4294901760
    %v784 = vsub.f32 %v185, %v783
    %785 = vmatpush1.msra.mxu0 %v784
    %786 = vmatprep.subr.mxu0 0.0
    %v787 = vand.u32 %v186, 4294901760
    %v788 = vsub.f32 %v186, %v787
    %789 = vmatpush1.msra.mxu0 %v788
    %790 = vmatprep.subr.mxu0 0.0
    %791 = vmatpush1.msra.mxu0 0.0
    %792 = vmatprep.subr.mxu0 0.0
    %793 = vmatpush1.msra.mxu0 0.0
    %794 = vmatprep.subr.mxu0 0.0
    %795 = vmatpush1.msra.mxu0 0.0
    %796 = vmatprep.subr.mxu0 0.0
    %797 = vmatpush1.msra.mxu0 0.0
    %798 = vmatprep.subr.mxu0 0.0
    %799 = vmatpush1.msra.mxu0 0.0
    %800 = vmatprep.subr.mxu0 0.0
    %801 = vmatpush1.msra.mxu0 0.0
    %802 = vmatprep.subr.mxu0 0.0
    %803 = vmatpush1.msra.mxu0 0.0
    %804 = vmatprep.subr.mxu0 0.0
    %805 = vmatpush1.msra.mxu0 0.0
    %806 = vmatprep.subr.mxu0 0.0
    %807 = vmatpush1.msra.mxu0 0.0
    %808 = vmatprep.subr.mxu0 0.0
    %809 = vmatpush1.msra.mxu0 0.0
    %810 = vmatprep.subr.mxu0 0.0
    %811 = vmatpush1.msra.mxu0 0.0
    %812 = vmatprep.subr.mxu0 0.0
    %813 = vmatpush1.msra.mxu0 0.0
    %814 = vmatprep.subr.mxu0 0.0
    %815 = vmatpush1.msra.mxu0 0.0
    %816 = vmatprep.subr.mxu0 0.0
    %817 = vmatpush1.msra.mxu0 0.0
    %818 = vmatprep.subr.mxu0 0.0
    %819 = vmatpush1.msra.mxu0 0.0
    %820 = vmatprep.subr.mxu0 0.0
    %821 = vmatpush1.msra.mxu0 0.0
    %822 = vmatprep.subr.mxu0 0.0
    %823 = vmatpush1.msra.mxu0 0.0
    %824 = vmatprep.subr.mxu0 0.0
    %825 = vmatpush1.msra.mxu0 0.0
    %826 = vmatprep.subr.mxu0 0.0
    %827 = vmatpush1.msra.mxu0 0.0
    %828 = vmatprep.subr.mxu0 0.0
    %829 = vmatpush1.msra.mxu0 0.0
    %830 = vmatprep.subr.mxu0 0.0
    %831 = vmatpush1.msra.mxu0 0.0
    %832 = vmatprep.subr.mxu0 0.0
    %833 = vmatpush1.msra.mxu0 0.0
    %834 = vmatprep.subr.mxu0 0.0
    %835 = vmatpush1.msra.mxu0 0.0
    %836 = vmatprep.subr.mxu0 0.0
    %837 = vmatpush1.msra.mxu0 0.0
    %838 = vmatprep.mubr.f32.mxu0 0.0
    %v839 = vand.u32 %v277, 4294901760
    %v840 = vsub.f32 %v277, %v839
    %841 = vmatmul.mubr.f32.gmra.mrb[0].mxu0 %v840
    %v842 = vpop.f32.mrb[0].mxu0
    %v843 = vadd.f32 %v665, %v842
    %v844 = vpop.f32.mrb[0].mxu0
    %845 = vmatprep.mubr.f32.mxu0 0.0
    %v846 = vand.u32 %v280, 4294901760
    %v847 = vsub.f32 %v280, %v846
    %848 = vmatmul.mubr.f32.gmra.mrb[0].mxu0 %v847
    %v849 = vpop.f32.mrb[0].mxu0
    %v850 = vadd.f32 %v671, %v849
    %v851 = vpop.f32.mrb[0].mxu0
    %852 = vmatprep.mubr.f32.mxu0 0.0
    %v853 = vand.u32 %v283, 4294901760
    %v854 = vsub.f32 %v283, %v853
    %855 = vmatmul.mubr.f32.gmra.mrb[0].mxu0 %v854
    %v856 = vpop.f32.mrb[0].mxu0
    %v857 = vadd.f32 %v677, %v856
    %v858 = vpop.f32.mrb[0].mxu0
    %859 = vmatprep.mubr.f32.mxu0 0.0
    %v860 = vand.u32 %v286, 4294901760
    %v861 = vsub.f32 %v286, %v860
    %862 = vmatmul.mubr.f32.gmra.mrb[0].mxu0 %v861
    %v863 = vpop.f32.mrb[0].mxu0
    %v864 = vadd.f32 %v683, %v863
    %v865 = vpop.f32.mrb[0].mxu0
    %866 = vmatprep.mubr.f32.mxu0 0.0
    %v867 = vand.u32 %v289, 4294901760
    %v868 = vsub.f32 %v289, %v867
    %869 = vmatmul.mubr.f32.gmra.mrb[0].mxu0 %v868
    %v870 = vpop.f32.mrb[0].mxu0
    %v871 = vadd.f32 %v689, %v870
    %v872 = vpop.f32.mrb[0].mxu0
    %873 = vmatprep.mubr.f32.mxu0 0.0
    %v874 = vand.u32 %v292, 4294901760
    %v875 = vsub.f32 %v292, %v874
    %876 = vmatmul.mubr.f32.gmra.mrb[0].mxu0 %v875
    %v877 = vpop.f32.mrb[0].mxu0
    %v878 = vadd.f32 %v695, %v877
    %v879 = vpop.f32.mrb[0].mxu0
    %880 = vmatprep.mubr.f32.mxu0 0.0
    %v881 = vand.u32 %v295, 4294901760
    %v882 = vsub.f32 %v295, %v881
    %883 = vmatmul.mubr.f32.gmra.mrb[0].mxu0 %v882
    %v884 = vpop.f32.mrb[0].mxu0
    %v885 = vadd.f32 %v701, %v884
    %v886 = vpop.f32.mrb[0].mxu0
    %887 = vmatprep.mubr.f32.mxu0 0.0
    %v888 = vand.u32 %v298, 4294901760
    %v889 = vsub.f32 %v298, %v888
    %890 = vmatmul.mubr.f32.gmra.mrb[0].mxu0 %v889
    %v891 = vpop.f32.mrb[0].mxu0
    %v892 = vadd.f32 %v707, %v891
    %v893 = vpop.f32.mrb[0].mxu0
    %894 = vmatprep.mubr.f32.mxu0 0.0
    %v895 = vand.u32 %v301, 4294901760
    %v896 = vsub.f32 %v301, %v895
    %897 = vmatmul.mubr.f32.gmra.mrb[0].mxu0 %v896
    %v898 = vpop.f32.mrb[0].mxu0
    %v899 = vadd.f32 %v713, %v898
    %v900 = vpop.f32.mrb[0].mxu0
    %901 = vmatprep.mubr.f32.mxu0 0.0
    %v902 = vand.u32 %v304, 4294901760
    %v903 = vsub.f32 %v304, %v902
    %904 = vmatmul.mubr.f32.gmra.mrb[0].mxu0 %v903
    %v905 = vpop.f32.mrb[0].mxu0
    %v906 = vadd.f32 %v719, %v905
    %v907 = vpop.f32.mrb[0].mxu0
    %908 = vmatprep.mubr.f32.mxu0 0.0
    %v909 = vand.u32 %v307, 4294901760
    %v910 = vsub.f32 %v307, %v909
    %911 = vmatmul.mubr.f32.gmra.mrb[0].mxu0 %v910
    %v912 = vpop.f32.mrb[0].mxu0
    %v913 = vadd.f32 %v725, %v912
    %v914 = vpop.f32.mrb[0].mxu0
    %915 = vmatprep.mubr.f32.mxu0 0.0
    %v916 = vand.u32 %v310, 4294901760
    %v917 = vsub.f32 %v310, %v916
    %918 = vmatmul.mubr.f32.gmra.mrb[0].mxu0 %v917
    %v919 = vpop.f32.mrb[0].mxu0
    %v920 = vadd.f32 %v731, %v919
    %v921 = vpop.f32.mrb[0].mxu0
    %922 = vmatprep.mubr.f32.mxu0 0.0
    %v923 = vand.u32 %v313, 4294901760
    %v924 = vsub.f32 %v313, %v923
    %925 = vmatmul.mubr.f32.gmra.mrb[0].mxu0 %v924
    %v926 = vpop.f32.mrb[0].mxu0
    %v927 = vadd.f32 %v737, %v926
    %v928 = vpop.f32.mrb[0].mxu0
    %929 = vmatprep.mubr.f32.mxu0 0.0
    %v930 = vand.u32 %v316, 4294901760
    %v931 = vsub.f32 %v316, %v930
    %932 = vmatmul.mubr.f32.gmra.mrb[0].mxu0 %v931
    %v933 = vpop.f32.mrb[0].mxu0
    %v934 = vadd.f32 %v743, %v933
    %v935 = vpop.f32.mrb[0].mxu0
    %936 = vmatprep.mubr.f32.mxu0 0.0
    %v937 = vand.u32 %v319, 4294901760
    %v938 = vsub.f32 %v319, %v937
    %939 = vmatmul.mubr.f32.gmra.mrb[0].mxu0 %v938
    %v940 = vpop.f32.mrb[0].mxu0
    %v941 = vadd.f32 %v749, %v940
    %v942 = vpop.f32.mrb[0].mxu0
    %943 = vmatprep.mubr.f32.mxu0 0.0
    %v944 = vand.u32 %v322, 4294901760
    %v945 = vsub.f32 %v322, %v944
    %946 = vmatmul.mubr.f32.gmra.mrb[0].mxu0 %v945
    %v947 = vpop.f32.mrb[0].mxu0
    %v948 = vadd.f32 %v755, %v947
    %v949 = vpop.f32.mrb[0].mxu0
    %950 = vdwg.mxu0
    %951 = vmatprep.subr.mxu0 0.0
    %v952 = vand.u32 %v179, 4294901760
    %953 = vmatpush1.msra.mxu0 %v952
    %954 = vmatprep.subr.mxu0 0.0
    %v955 = vand.u32 %v180, 4294901760
    %956 = vmatpush1.msra.mxu0 %v955
    %957 = vmatprep.subr.mxu0 0.0
    %v958 = vand.u32 %v181, 4294901760
    %959 = vmatpush1.msra.mxu0 %v958
    %960 = vmatprep.subr.mxu0 0.0
    %v961 = vand.u32 %v182, 4294901760
    %962 = vmatpush1.msra.mxu0 %v961
    %963 = vmatprep.subr.mxu0 0.0
    %v964 = vand.u32 %v183, 4294901760
    %965 = vmatpush1.msra.mxu0 %v964
    %966 = vmatprep.subr.mxu0 0.0
    %v967 = vand.u32 %v184, 4294901760
    %968 = vmatpush1.msra.mxu0 %v967
    %969 = vmatprep.subr.mxu0 0.0
    %v970 = vand.u32 %v185, 4294901760
    %971 = vmatpush1.msra.mxu0 %v970
    %972 = vmatprep.subr.mxu0 0.0
    %v973 = vand.u32 %v186, 4294901760
    %974 = vmatpush1.msra.mxu0 %v973
    %975 = vmatprep.subr.mxu0 0.0
    %976 = vmatpush1.msra.mxu0 0.0
    %977 = vmatprep.subr.mxu0 0.0
    %978 = vmatpush1.msra.mxu0 0.0
    %979 = vmatprep.subr.mxu0 0.0
    %980 = vmatpush1.msra.mxu0 0.0
    %981 = vmatprep.subr.mxu0 0.0
    %982 = vmatpush1.msra.mxu0 0.0
    %983 = vmatprep.subr.mxu0 0.0
    %984 = vmatpush1.msra.mxu0 0.0
    %985 = vmatprep.subr.mxu0 0.0
    %986 = vmatpush1.msra.mxu0 0.0
    %987 = vmatprep.subr.mxu0 0.0
    %988 = vmatpush1.msra.mxu0 0.0
    %989 = vmatprep.subr.mxu0 0.0
    %990 = vmatpush1.msra.mxu0 0.0
    %991 = vmatprep.subr.mxu0 0.0
    %992 = vmatpush1.msra.mxu0 0.0
    %993 = vmatprep.subr.mxu0 0.0
    %994 = vmatpush1.msra.mxu0 0.0
    %995 = vmatprep.subr.mxu0 0.0
    %996 = vmatpush1.msra.mxu0 0.0
    %997 = vmatprep.subr.mxu0 0.0
    %998 = vmatpush1.msra.mxu0 0.0
    %999 = vmatprep.subr.mxu0 0.0
    %1000 = vmatpush1.msra.mxu0 0.0
    %1001 = vmatprep.subr.mxu0 0.0
    %1002 = vmatpush1.msra.mxu0 0.0
    %1003 = vmatprep.subr.mxu0 0.0
    %1004 = vmatpush1.msra.mxu0 0.0
    %1005 = vmatprep.subr.mxu0 0.0
    %1006 = vmatpush1.msra.mxu0 0.0
    %1007 = vmatprep.subr.mxu0 0.0
    %1008 = vmatpush1.msra.mxu0 0.0
    %1009 = vmatprep.subr.mxu0 0.0
    %1010 = vmatpush1.msra.mxu0 0.0
    %1011 = vmatprep.subr.mxu0 0.0
    %1012 = vmatpush1.msra.mxu0 0.0
    %1013 = vmatprep.subr.mxu0 0.0
    %1014 = vmatpush1.msra.mxu0 0.0
    %1015 = vmatprep.subr.mxu0 0.0
    %1016 = vmatpush1.msra.mxu0 0.0
    %1017 = vmatprep.subr.mxu0 0.0
    %1018 = vmatpush1.msra.mxu0 0.0
    %1019 = vmatprep.subr.mxu0 0.0
    %1020 = vmatpush1.msra.mxu0 0.0
    %1021 = vmatprep.subr.mxu0 0.0
    %1022 = vmatpush1.msra.mxu0 0.0
    %1023 = vmatprep.mubr.f32.mxu0 0.0
    %v1024 = vand.u32 %v277, 4294901760
    %v1025 = vsub.f32 %v277, %v1024
    %v1026 = vand.u32 %v1025, 4294901760
    %1027 = vmatmul.mubr.f32.gmra.mrb[0].mxu0 %v1026
    %v1028 = vpop.f32.mrb[0].mxu0
    %v1029 = vadd.f32 %v843, %v1028
    %v1030 = vpop.f32.mrb[0].mxu0
    %1031 = vmatprep.mubr.f32.mxu0 0.0
    %v1032 = vand.u32 %v280, 4294901760
    %v1033 = vsub.f32 %v280, %v1032
    %v1034 = vand.u32 %v1033, 4294901760
    %1035 = vmatmul.mubr.f32.gmra.mrb[0].mxu0 %v1034
    %v1036 = vpop.f32.mrb[0].mxu0
    %v1037 = vadd.f32 %v850, %v1036
    %v1038 = vpop.f32.mrb[0].mxu0
    %1039 = vmatprep.mubr.f32.mxu0 0.0
    %v1040 = vand.u32 %v283, 4294901760
    %v1041 = vsub.f32 %v283, %v1040
    %v1042 = vand.u32 %v1041, 4294901760
    %1043 = vmatmul.mubr.f32.gmra.mrb[0].mxu0 %v1042
    %v1044 = vpop.f32.mrb[0].mxu0
    %v1045 = vadd.f32 %v857, %v1044
    %v1046 = vpop.f32.mrb[0].mxu0
    %1047 = vmatprep.mubr.f32.mxu0 0.0
    %v1048 = vand.u32 %v286, 4294901760
    %v1049 = vsub.f32 %v286, %v1048
    %v1050 = vand.u32 %v1049, 4294901760
    %1051 = vmatmul.mubr.f32.gmra.mrb[0].mxu0 %v1050
    %v1052 = vpop.f32.mrb[0].mxu0
    %v1053 = vadd.f32 %v864, %v1052
    %v1054 = vpop.f32.mrb[0].mxu0
    %1055 = vmatprep.mubr.f32.mxu0 0.0
    %v1056 = vand.u32 %v289, 4294901760
    %v1057 = vsub.f32 %v289, %v1056
    %v1058 = vand.u32 %v1057, 4294901760
    %1059 = vmatmul.mubr.f32.gmra.mrb[0].mxu0 %v1058
    %v1060 = vpop.f32.mrb[0].mxu0
    %v1061 = vadd.f32 %v871, %v1060
    %v1062 = vpop.f32.mrb[0].mxu0
    %1063 = vmatprep.mubr.f32.mxu0 0.0
    %v1064 = vand.u32 %v292, 4294901760
    %v1065 = vsub.f32 %v292, %v1064
    %v1066 = vand.u32 %v1065, 4294901760
    %1067 = vmatmul.mubr.f32.gmra.mrb[0].mxu0 %v1066
    %v1068 = vpop.f32.mrb[0].mxu0
    %v1069 = vadd.f32 %v878, %v1068
    %v1070 = vpop.f32.mrb[0].mxu0
    %1071 = vmatprep.mubr.f32.mxu0 0.0
    %v1072 = vand.u32 %v295, 4294901760
    %v1073 = vsub.f32 %v295, %v1072
    %v1074 = vand.u32 %v1073, 4294901760
    %1075 = vmatmul.mubr.f32.gmra.mrb[0].mxu0 %v1074
    %v1076 = vpop.f32.mrb[0].mxu0
    %v1077 = vadd.f32 %v885, %v1076
    %v1078 = vpop.f32.mrb[0].mxu0
    %1079 = vmatprep.mubr.f32.mxu0 0.0
    %v1080 = vand.u32 %v298, 4294901760
    %v1081 = vsub.f32 %v298, %v1080
    %v1082 = vand.u32 %v1081, 4294901760
    %1083 = vmatmul.mubr.f32.gmra.mrb[0].mxu0 %v1082
    %v1084 = vpop.f32.mrb[0].mxu0
    %v1085 = vadd.f32 %v892, %v1084
    %v1086 = vpop.f32.mrb[0].mxu0
    %1087 = vmatprep.mubr.f32.mxu0 0.0
    %v1088 = vand.u32 %v301, 4294901760
    %v1089 = vsub.f32 %v301, %v1088
    %v1090 = vand.u32 %v1089, 4294901760
    %1091 = vmatmul.mubr.f32.gmra.mrb[0].mxu0 %v1090
    %v1092 = vpop.f32.mrb[0].mxu0
    %v1093 = vadd.f32 %v899, %v1092
    %v1094 = vpop.f32.mrb[0].mxu0
    %1095 = vmatprep.mubr.f32.mxu0 0.0
    %v1096 = vand.u32 %v304, 4294901760
    %v1097 = vsub.f32 %v304, %v1096
    %v1098 = vand.u32 %v1097, 4294901760
    %1099 = vmatmul.mubr.f32.gmra.mrb[0].mxu0 %v1098
    %v1100 = vpop.f32.mrb[0].mxu0
    %v1101 = vadd.f32 %v906, %v1100
    %v1102 = vpop.f32.mrb[0].mxu0
    %1103 = vmatprep.mubr.f32.mxu0 0.0
    %v1104 = vand.u32 %v307, 4294901760
    %v1105 = vsub.f32 %v307, %v1104
    %v1106 = vand.u32 %v1105, 4294901760
    %1107 = vmatmul.mubr.f32.gmra.mrb[0].mxu0 %v1106
    %v1108 = vpop.f32.mrb[0].mxu0
    %v1109 = vadd.f32 %v913, %v1108
    %v1110 = vpop.f32.mrb[0].mxu0
    %1111 = vmatprep.mubr.f32.mxu0 0.0
    %v1112 = vand.u32 %v310, 4294901760
    %v1113 = vsub.f32 %v310, %v1112
    %v1114 = vand.u32 %v1113, 4294901760
    %1115 = vmatmul.mubr.f32.gmra.mrb[0].mxu0 %v1114
    %v1116 = vpop.f32.mrb[0].mxu0
    %v1117 = vadd.f32 %v920, %v1116
    %v1118 = vpop.f32.mrb[0].mxu0
    %1119 = vmatprep.mubr.f32.mxu0 0.0
    %v1120 = vand.u32 %v313, 4294901760
    %v1121 = vsub.f32 %v313, %v1120
    %v1122 = vand.u32 %v1121, 4294901760
    %1123 = vmatmul.mubr.f32.gmra.mrb[0].mxu0 %v1122
    %v1124 = vpop.f32.mrb[0].mxu0
    %v1125 = vadd.f32 %v927, %v1124
    %v1126 = vpop.f32.mrb[0].mxu0
    %1127 = vmatprep.mubr.f32.mxu0 0.0
    %v1128 = vand.u32 %v316, 4294901760
    %v1129 = vsub.f32 %v316, %v1128
    %v1130 = vand.u32 %v1129, 4294901760
    %1131 = vmatmul.mubr.f32.gmra.mrb[0].mxu0 %v1130
    %v1132 = vpop.f32.mrb[0].mxu0
    %v1133 = vadd.f32 %v934, %v1132
    %v1134 = vpop.f32.mrb[0].mxu0
    %1135 = vmatprep.mubr.f32.mxu0 0.0
    %v1136 = vand.u32 %v319, 4294901760
    %v1137 = vsub.f32 %v319, %v1136
    %v1138 = vand.u32 %v1137, 4294901760
    %1139 = vmatmul.mubr.f32.gmra.mrb[0].mxu0 %v1138
    %v1140 = vpop.f32.mrb[0].mxu0
    %v1141 = vadd.f32 %v941, %v1140
    %v1142 = vpop.f32.mrb[0].mxu0
    %1143 = vmatprep.mubr.f32.mxu0 0.0
    %v1144 = vand.u32 %v322, 4294901760
    %v1145 = vsub.f32 %v322, %v1144
    %v1146 = vand.u32 %v1145, 4294901760
    %1147 = vmatmul.mubr.f32.gmra.mrb[0].mxu0 %v1146
    %v1148 = vpop.f32.mrb[0].mxu0
    %v1149 = vadd.f32 %v948, %v1148
    %v1150 = vpop.f32.mrb[0].mxu0
    %1151 = vdwg.mxu0
    %1152 = vmatprep.subr.mxu0 0.0
    %v1153 = vand.u32 %v179, 4294901760
    %v1154 = vsub.f32 %v179, %v1153
    %v1155 = vand.u32 %v1154, 4294901760
    %1156 = vmatpush1.msra.mxu0 %v1155
    %1157 = vmatprep.subr.mxu0 0.0
    %v1158 = vand.u32 %v180, 4294901760
    %v1159 = vsub.f32 %v180, %v1158
    %v1160 = vand.u32 %v1159, 4294901760
    %1161 = vmatpush1.msra.mxu0 %v1160
    %1162 = vmatprep.subr.mxu0 0.0
    %v1163 = vand.u32 %v181, 4294901760
    %v1164 = vsub.f32 %v181, %v1163
    %v1165 = vand.u32 %v1164, 4294901760
    %1166 = vmatpush1.msra.mxu0 %v1165
    %1167 = vmatprep.subr.mxu0 0.0
    %v1168 = vand.u32 %v182, 4294901760
    %v1169 = vsub.f32 %v182, %v1168
    %v1170 = vand.u32 %v1169, 4294901760
    %1171 = vmatpush1.msra.mxu0 %v1170
    %1172 = vmatprep.subr.mxu0 0.0
    %v1173 = vand.u32 %v183, 4294901760
    %v1174 = vsub.f32 %v183, %v1173
    %v1175 = vand.u32 %v1174, 4294901760
    %1176 = vmatpush1.msra.mxu0 %v1175
    %1177 = vmatprep.subr.mxu0 0.0
    %v1178 = vand.u32 %v184, 4294901760
    %v1179 = vsub.f32 %v184, %v1178
    %v1180 = vand.u32 %v1179, 4294901760
    %1181 = vmatpush1.msra.mxu0 %v1180
    %1182 = vmatprep.subr.mxu0 0.0
    %v1183 = vand.u32 %v185, 4294901760
    %v1184 = vsub.f32 %v185, %v1183
    %v1185 = vand.u32 %v1184, 4294901760
    %1186 = vmatpush1.msra.mxu0 %v1185
    %1187 = vmatprep.subr.mxu0 0.0
    %v1188 = vand.u32 %v186, 4294901760
    %v1189 = vsub.f32 %v186, %v1188
    %v1190 = vand.u32 %v1189, 4294901760
    %1191 = vmatpush1.msra.mxu0 %v1190
    %1192 = vmatprep.subr.mxu0 0.0
    %1193 = vmatpush1.msra.mxu0 0.0
    %1194 = vmatprep.subr.mxu0 0.0
    %1195 = vmatpush1.msra.mxu0 0.0
    %1196 = vmatprep.subr.mxu0 0.0
    %1197 = vmatpush1.msra.mxu0 0.0
    %1198 = vmatprep.subr.mxu0 0.0
    %1199 = vmatpush1.msra.mxu0 0.0
    %1200 = vmatprep.subr.mxu0 0.0
    %1201 = vmatpush1.msra.mxu0 0.0
    %1202 = vmatprep.subr.mxu0 0.0
    %1203 = vmatpush1.msra.mxu0 0.0
    %1204 = vmatprep.subr.mxu0 0.0
    %1205 = vmatpush1.msra.mxu0 0.0
    %1206 = vmatprep.subr.mxu0 0.0
    %1207 = vmatpush1.msra.mxu0 0.0
    %1208 = vmatprep.subr.mxu0 0.0
    %1209 = vmatpush1.msra.mxu0 0.0
    %1210 = vmatprep.subr.mxu0 0.0
    %1211 = vmatpush1.msra.mxu0 0.0
    %1212 = vmatprep.subr.mxu0 0.0
    %1213 = vmatpush1.msra.mxu0 0.0
    %1214 = vmatprep.subr.mxu0 0.0
    %1215 = vmatpush1.msra.mxu0 0.0
    %1216 = vmatprep.subr.mxu0 0.0
    %1217 = vmatpush1.msra.mxu0 0.0
    %1218 = vmatprep.subr.mxu0 0.0
    %1219 = vmatpush1.msra.mxu0 0.0
    %1220 = vmatprep.subr.mxu0 0.0
    %1221 = vmatpush1.msra.mxu0 0.0
    %1222 = vmatprep.subr.mxu0 0.0
    %1223 = vmatpush1.msra.mxu0 0.0
    %1224 = vmatprep.subr.mxu0 0.0
    %1225 = vmatpush1.msra.mxu0 0.0
    %1226 = vmatprep.subr.mxu0 0.0
    %1227 = vmatpush1.msra.mxu0 0.0
    %1228 = vmatprep.subr.mxu0 0.0
    %1229 = vmatpush1.msra.mxu0 0.0
    %1230 = vmatprep.subr.mxu0 0.0
    %1231 = vmatpush1.msra.mxu0 0.0
    %1232 = vmatprep.subr.mxu0 0.0
    %1233 = vmatpush1.msra.mxu0 0.0
    %1234 = vmatprep.subr.mxu0 0.0
    %1235 = vmatpush1.msra.mxu0 0.0
    %1236 = vmatprep.subr.mxu0 0.0
    %1237 = vmatpush1.msra.mxu0 0.0
    %1238 = vmatprep.subr.mxu0 0.0
    %1239 = vmatpush1.msra.mxu0 0.0
    %1240 = vmatprep.mubr.f32.mxu0 0.0
    %v1241 = vand.u32 %v277, 4294901760
    %1242 = vmatmul.mubr.f32.gmra.mrb[0].mxu0 %v1241
    %v1243 = vpop.f32.mrb[0].mxu0
    %v1244 = vadd.f32 %v1029, %v1243
    %v1245 = vpop.f32.mrb[0].mxu0
    %1246 = vmatprep.mubr.f32.mxu0 0.0
    %v1247 = vand.u32 %v280, 4294901760
    %1248 = vmatmul.mubr.f32.gmra.mrb[0].mxu0 %v1247
    %v1249 = vpop.f32.mrb[0].mxu0
    %v1250 = vadd.f32 %v1037, %v1249
    %v1251 = vpop.f32.mrb[0].mxu0
    %1252 = vmatprep.mubr.f32.mxu0 0.0
    %v1253 = vand.u32 %v283, 4294901760
    %1254 = vmatmul.mubr.f32.gmra.mrb[0].mxu0 %v1253
    %v1255 = vpop.f32.mrb[0].mxu0
    %v1256 = vadd.f32 %v1045, %v1255
    %v1257 = vpop.f32.mrb[0].mxu0
    %1258 = vmatprep.mubr.f32.mxu0 0.0
    %v1259 = vand.u32 %v286, 4294901760
    %1260 = vmatmul.mubr.f32.gmra.mrb[0].mxu0 %v1259
    %v1261 = vpop.f32.mrb[0].mxu0
    %v1262 = vadd.f32 %v1053, %v1261
    %v1263 = vpop.f32.mrb[0].mxu0
    %1264 = vmatprep.mubr.f32.mxu0 0.0
    %v1265 = vand.u32 %v289, 4294901760
    %1266 = vmatmul.mubr.f32.gmra.mrb[0].mxu0 %v1265
    %v1267 = vpop.f32.mrb[0].mxu0
    %v1268 = vadd.f32 %v1061, %v1267
    %v1269 = vpop.f32.mrb[0].mxu0
    %1270 = vmatprep.mubr.f32.mxu0 0.0
    %v1271 = vand.u32 %v292, 4294901760
    %1272 = vmatmul.mubr.f32.gmra.mrb[0].mxu0 %v1271
    %v1273 = vpop.f32.mrb[0].mxu0
    %v1274 = vadd.f32 %v1069, %v1273
    %v1275 = vpop.f32.mrb[0].mxu0
    %1276 = vmatprep.mubr.f32.mxu0 0.0
    %v1277 = vand.u32 %v295, 4294901760
    %1278 = vmatmul.mubr.f32.gmra.mrb[0].mxu0 %v1277
    %v1279 = vpop.f32.mrb[0].mxu0
    %v1280 = vadd.f32 %v1077, %v1279
    %v1281 = vpop.f32.mrb[0].mxu0
    %1282 = vmatprep.mubr.f32.mxu0 0.0
    %v1283 = vand.u32 %v298, 4294901760
    %1284 = vmatmul.mubr.f32.gmra.mrb[0].mxu0 %v1283
    %v1285 = vpop.f32.mrb[0].mxu0
    %v1286 = vadd.f32 %v1085, %v1285
    %v1287 = vpop.f32.mrb[0].mxu0
    %1288 = vmatprep.mubr.f32.mxu0 0.0
    %v1289 = vand.u32 %v301, 4294901760
    %1290 = vmatmul.mubr.f32.gmra.mrb[0].mxu0 %v1289
    %v1291 = vpop.f32.mrb[0].mxu0
    %v1292 = vadd.f32 %v1093, %v1291
    %v1293 = vpop.f32.mrb[0].mxu0
    %1294 = vmatprep.mubr.f32.mxu0 0.0
    %v1295 = vand.u32 %v304, 4294901760
    %1296 = vmatmul.mubr.f32.gmra.mrb[0].mxu0 %v1295
    %v1297 = vpop.f32.mrb[0].mxu0
    %v1298 = vadd.f32 %v1101, %v1297
    %v1299 = vpop.f32.mrb[0].mxu0
    %1300 = vmatprep.mubr.f32.mxu0 0.0
    %v1301 = vand.u32 %v307, 4294901760
    %1302 = vmatmul.mubr.f32.gmra.mrb[0].mxu0 %v1301
    %v1303 = vpop.f32.mrb[0].mxu0
    %v1304 = vadd.f32 %v1109, %v1303
    %v1305 = vpop.f32.mrb[0].mxu0
    %1306 = vmatprep.mubr.f32.mxu0 0.0
    %v1307 = vand.u32 %v310, 4294901760
    %1308 = vmatmul.mubr.f32.gmra.mrb[0].mxu0 %v1307
    %v1309 = vpop.f32.mrb[0].mxu0
    %v1310 = vadd.f32 %v1117, %v1309
    %v1311 = vpop.f32.mrb[0].mxu0
    %1312 = vmatprep.mubr.f32.mxu0 0.0
    %v1313 = vand.u32 %v313, 4294901760
    %1314 = vmatmul.mubr.f32.gmra.mrb[0].mxu0 %v1313
    %v1315 = vpop.f32.mrb[0].mxu0
    %v1316 = vadd.f32 %v1125, %v1315
    %v1317 = vpop.f32.mrb[0].mxu0
    %1318 = vmatprep.mubr.f32.mxu0 0.0
    %v1319 = vand.u32 %v316, 4294901760
    %1320 = vmatmul.mubr.f32.gmra.mrb[0].mxu0 %v1319
    %v1321 = vpop.f32.mrb[0].mxu0
    %v1322 = vadd.f32 %v1133, %v1321
    %v1323 = vpop.f32.mrb[0].mxu0
    %1324 = vmatprep.mubr.f32.mxu0 0.0
    %v1325 = vand.u32 %v319, 4294901760
    %1326 = vmatmul.mubr.f32.gmra.mrb[0].mxu0 %v1325
    %v1327 = vpop.f32.mrb[0].mxu0
    %v1328 = vadd.f32 %v1141, %v1327
    %v1329 = vpop.f32.mrb[0].mxu0
    %1330 = vmatprep.mubr.f32.mxu0 0.0
    %v1331 = vand.u32 %v322, 4294901760
    %1332 = vmatmul.mubr.f32.gmra.mrb[0].mxu0 %v1331
    %v1333 = vpop.f32.mrb[0].mxu0
    %v1334 = vadd.f32 %v1149, %v1333
    %v1335 = vpop.f32.mrb[0].mxu0
    %1336 = vdwg.mxu0
    %1337 = vmatprep.subr.mxu0 0.0
    %v1338 = vand.u32 %v179, 4294901760
    %1339 = vmatpush1.msra.mxu0 %v1338
    %1340 = vmatprep.subr.mxu0 0.0
    %v1341 = vand.u32 %v180, 4294901760
    %1342 = vmatpush1.msra.mxu0 %v1341
    %1343 = vmatprep.subr.mxu0 0.0
    %v1344 = vand.u32 %v181, 4294901760
    %1345 = vmatpush1.msra.mxu0 %v1344
    %1346 = vmatprep.subr.mxu0 0.0
    %v1347 = vand.u32 %v182, 4294901760
    %1348 = vmatpush1.msra.mxu0 %v1347
    %1349 = vmatprep.subr.mxu0 0.0
    %v1350 = vand.u32 %v183, 4294901760
    %1351 = vmatpush1.msra.mxu0 %v1350
    %1352 = vmatprep.subr.mxu0 0.0
    %v1353 = vand.u32 %v184, 4294901760
    %1354 = vmatpush1.msra.mxu0 %v1353
    %1355 = vmatprep.subr.mxu0 0.0
    %v1356 = vand.u32 %v185, 4294901760
    %1357 = vmatpush1.msra.mxu0 %v1356
    %1358 = vmatprep.subr.mxu0 0.0
    %v1359 = vand.u32 %v186, 4294901760
    %1360 = vmatpush1.msra.mxu0 %v1359
    %1361 = vmatprep.subr.mxu0 0.0
    %1362 = vmatpush1.msra.mxu0 0.0
    %1363 = vmatprep.subr.mxu0 0.0
    %1364 = vmatpush1.msra.mxu0 0.0
    %1365 = vmatprep.subr.mxu0 0.0
    %1366 = vmatpush1.msra.mxu0 0.0
    %1367 = vmatprep.subr.mxu0 0.0
    %1368 = vmatpush1.msra.mxu0 0.0
    %1369 = vmatprep.subr.mxu0 0.0
    %1370 = vmatpush1.msra.mxu0 0.0
    %1371 = vmatprep.subr.mxu0 0.0
    %1372 = vmatpush1.msra.mxu0 0.0
    %1373 = vmatprep.subr.mxu0 0.0
    %1374 = vmatpush1.msra.mxu0 0.0
    %1375 = vmatprep.subr.mxu0 0.0
    %1376 = vmatpush1.msra.mxu0 0.0
    %1377 = vmatprep.subr.mxu0 0.0
    %1378 = vmatpush1.msra.mxu0 0.0
    %1379 = vmatprep.subr.mxu0 0.0
    %1380 = vmatpush1.msra.mxu0 0.0
    %1381 = vmatprep.subr.mxu0 0.0
    %1382 = vmatpush1.msra.mxu0 0.0
    %1383 = vmatprep.subr.mxu0 0.0
    %1384 = vmatpush1.msra.mxu0 0.0
    %1385 = vmatprep.subr.mxu0 0.0
    %1386 = vmatpush1.msra.mxu0 0.0
    %1387 = vmatprep.subr.mxu0 0.0
    %1388 = vmatpush1.msra.mxu0 0.0
    %1389 = vmatprep.subr.mxu0 0.0
    %1390 = vmatpush1.msra.mxu0 0.0
    %1391 = vmatprep.subr.mxu0 0.0
    %1392 = vmatpush1.msra.mxu0 0.0
    %1393 = vmatprep.subr.mxu0 0.0
    %1394 = vmatpush1.msra.mxu0 0.0
    %1395 = vmatprep.subr.mxu0 0.0
    %1396 = vmatpush1.msra.mxu0 0.0
    %1397 = vmatprep.subr.mxu0 0.0
    %1398 = vmatpush1.msra.mxu0 0.0
    %1399 = vmatprep.subr.mxu0 0.0
    %1400 = vmatpush1.msra.mxu0 0.0
    %1401 = vmatprep.subr.mxu0 0.0
    %1402 = vmatpush1.msra.mxu0 0.0
    %1403 = vmatprep.subr.mxu0 0.0
    %1404 = vmatpush1.msra.mxu0 0.0
    %1405 = vmatprep.subr.mxu0 0.0
    %1406 = vmatpush1.msra.mxu0 0.0
    %1407 = vmatprep.subr.mxu0 0.0
    %1408 = vmatpush1.msra.mxu0 0.0
    %1409 = vmatprep.mubr.f32.mxu0 0.0
    %v1410 = vand.u32 %v277, 4294901760
    %1411 = vmatmul.mubr.f32.gmra.mrb[0].mxu0 %v1410
    %v1412 = vpop.f32.mrb[0].mxu0
    %v1413 = vadd.f32 %v1244, %v1412
    %v1414 = vpop.f32.mrb[0].mxu0
    %1415 = vmatprep.mubr.f32.mxu0 0.0
    %v1416 = vand.u32 %v280, 4294901760
    %1417 = vmatmul.mubr.f32.gmra.mrb[0].mxu0 %v1416
    %v1418 = vpop.f32.mrb[0].mxu0
    %v1419 = vadd.f32 %v1250, %v1418
    %v1420 = vpop.f32.mrb[0].mxu0
    %1421 = vmatprep.mubr.f32.mxu0 0.0
    %v1422 = vand.u32 %v283, 4294901760
    %1423 = vmatmul.mubr.f32.gmra.mrb[0].mxu0 %v1422
    %v1424 = vpop.f32.mrb[0].mxu0
    %v1425 = vadd.f32 %v1256, %v1424
    %v1426 = vpop.f32.mrb[0].mxu0
    %1427 = vmatprep.mubr.f32.mxu0 0.0
    %v1428 = vand.u32 %v286, 4294901760
    %1429 = vmatmul.mubr.f32.gmra.mrb[0].mxu0 %v1428
    %v1430 = vpop.f32.mrb[0].mxu0
    %v1431 = vadd.f32 %v1262, %v1430
    %v1432 = vpop.f32.mrb[0].mxu0
    %1433 = vmatprep.mubr.f32.mxu0 0.0
    %v1434 = vand.u32 %v289, 4294901760
    %1435 = vmatmul.mubr.f32.gmra.mrb[0].mxu0 %v1434
    %v1436 = vpop.f32.mrb[0].mxu0
    %v1437 = vadd.f32 %v1268, %v1436
    %v1438 = vpop.f32.mrb[0].mxu0
    %1439 = vmatprep.mubr.f32.mxu0 0.0
    %v1440 = vand.u32 %v292, 4294901760
    %1441 = vmatmul.mubr.f32.gmra.mrb[0].mxu0 %v1440
    %v1442 = vpop.f32.mrb[0].mxu0
    %v1443 = vadd.f32 %v1274, %v1442
    %v1444 = vpop.f32.mrb[0].mxu0
    %1445 = vmatprep.mubr.f32.mxu0 0.0
    %v1446 = vand.u32 %v295, 4294901760
    %1447 = vmatmul.mubr.f32.gmra.mrb[0].mxu0 %v1446
    %v1448 = vpop.f32.mrb[0].mxu0
    %v1449 = vadd.f32 %v1280, %v1448
    %v1450 = vpop.f32.mrb[0].mxu0
    %1451 = vmatprep.mubr.f32.mxu0 0.0
    %v1452 = vand.u32 %v298, 4294901760
    %1453 = vmatmul.mubr.f32.gmra.mrb[0].mxu0 %v1452
    %v1454 = vpop.f32.mrb[0].mxu0
    %v1455 = vadd.f32 %v1286, %v1454
    %v1456 = vpop.f32.mrb[0].mxu0
    %1457 = vmatprep.mubr.f32.mxu0 0.0
    %v1458 = vand.u32 %v301, 4294901760
    %1459 = vmatmul.mubr.f32.gmra.mrb[0].mxu0 %v1458
    %v1460 = vpop.f32.mrb[0].mxu0
    %v1461 = vadd.f32 %v1292, %v1460
    %v1462 = vpop.f32.mrb[0].mxu0
    %1463 = vmatprep.mubr.f32.mxu0 0.0
    %v1464 = vand.u32 %v304, 4294901760
    %1465 = vmatmul.mubr.f32.gmra.mrb[0].mxu0 %v1464
    %v1466 = vpop.f32.mrb[0].mxu0
    %v1467 = vadd.f32 %v1298, %v1466
    %v1468 = vpop.f32.mrb[0].mxu0
    %1469 = vmatprep.mubr.f32.mxu0 0.0
    %v1470 = vand.u32 %v307, 4294901760
    %1471 = vmatmul.mubr.f32.gmra.mrb[0].mxu0 %v1470
    %v1472 = vpop.f32.mrb[0].mxu0
    %v1473 = vadd.f32 %v1304, %v1472
    %v1474 = vpop.f32.mrb[0].mxu0
    %1475 = vmatprep.mubr.f32.mxu0 0.0
    %v1476 = vand.u32 %v310, 4294901760
    %1477 = vmatmul.mubr.f32.gmra.mrb[0].mxu0 %v1476
    %v1478 = vpop.f32.mrb[0].mxu0
    %v1479 = vadd.f32 %v1310, %v1478
    %v1480 = vpop.f32.mrb[0].mxu0
    %1481 = vmatprep.mubr.f32.mxu0 0.0
    %v1482 = vand.u32 %v313, 4294901760
    %1483 = vmatmul.mubr.f32.gmra.mrb[0].mxu0 %v1482
    %v1484 = vpop.f32.mrb[0].mxu0
    %v1485 = vadd.f32 %v1316, %v1484
    %v1486 = vpop.f32.mrb[0].mxu0
    %1487 = vmatprep.mubr.f32.mxu0 0.0
    %v1488 = vand.u32 %v316, 4294901760
    %1489 = vmatmul.mubr.f32.gmra.mrb[0].mxu0 %v1488
    %v1490 = vpop.f32.mrb[0].mxu0
    %v1491 = vadd.f32 %v1322, %v1490
    %v1492 = vpop.f32.mrb[0].mxu0
    %1493 = vmatprep.mubr.f32.mxu0 0.0
    %v1494 = vand.u32 %v319, 4294901760
    %1495 = vmatmul.mubr.f32.gmra.mrb[0].mxu0 %v1494
    %v1496 = vpop.f32.mrb[0].mxu0
    %v1497 = vadd.f32 %v1328, %v1496
    %v1498 = vpop.f32.mrb[0].mxu0
    %1499 = vmatprep.mubr.f32.mxu0 0.0
    %v1500 = vand.u32 %v322, 4294901760
    %1501 = vmatmul.mubr.f32.gmra.mrb[0].mxu0 %v1500
    %v1502 = vpop.f32.mrb[0].mxu0
    %v1503 = vadd.f32 %v1334, %v1502
    %v1504 = vpop.f32.mrb[0].mxu0
    %1505 = vdwg.mxu0
    %v1506 = vtanh.pop %v1413
    %v1507 = vtanh.pop %v1419
    %v1508 = vtanh.pop %v1425
    %v1509 = vtanh.pop %v1431
    %v1510 = vtanh.pop %v1437
    %v1511 = vtanh.pop %v1443
    %v1512 = vtanh.pop %v1449
    %v1513 = vtanh.pop %v1455
    %v1514 = vtanh.pop %v1461
    %v1515 = vtanh.pop %v1467
    %v1516 = vtanh.pop %v1473
    %v1517 = vtanh.pop %v1479
    %v1518 = vtanh.pop %v1485
    %v1519 = vtanh.pop %v1491
    %v1520 = vtanh.pop %v1497
    %v1521 = vtanh.pop %v1503
    %v1522 = vld [vmem:[%s3] sm:$0xff]
    %1523 = vset.pattern.permute.xlu0 4
    %1524 = vperm.xlu0 %1523, %v19
    %v1525 = vpop.permute.xlu0 %1524
    %1527 = vmatprep.subr.mxu0 0.0
    %v1528 = vand.u32 %v1506, 4294901760
    %1529 = vmatpush1.msra.mxu0 %v1528
    %1530 = vmatprep.subr.mxu0 0.0
    %v1531 = vand.u32 %v1507, 4294901760
    %1532 = vmatpush1.msra.mxu0 %v1531
    %1533 = vmatprep.subr.mxu0 0.0
    %v1534 = vand.u32 %v1508, 4294901760
    %1535 = vmatpush1.msra.mxu0 %v1534
    %1536 = vmatprep.subr.mxu0 0.0
    %v1537 = vand.u32 %v1509, 4294901760
    %1538 = vmatpush1.msra.mxu0 %v1537
    %1539 = vmatprep.subr.mxu0 0.0
    %v1540 = vand.u32 %v1510, 4294901760
    %1541 = vmatpush1.msra.mxu0 %v1540
    %1542 = vmatprep.subr.mxu0 0.0
    %v1543 = vand.u32 %v1511, 4294901760
    %1544 = vmatpush1.msra.mxu0 %v1543
    %1545 = vmatprep.subr.mxu0 0.0
    %v1546 = vand.u32 %v1512, 4294901760
    %1547 = vmatpush1.msra.mxu0 %v1546
    %1548 = vmatprep.subr.mxu0 0.0
    %v1549 = vand.u32 %v1513, 4294901760
    %1550 = vmatpush1.msra.mxu0 %v1549
    %1551 = vmatprep.subr.mxu0 0.0
    %v1552 = vand.u32 %v1514, 4294901760
    %1553 = vmatpush1.msra.mxu0 %v1552
    %1554 = vmatprep.subr.mxu0 0.0
    %v1555 = vand.u32 %v1515, 4294901760
    %1556 = vmatpush1.msra.mxu0 %v1555
    %1557 = vmatprep.subr.mxu0 0.0
    %v1558 = vand.u32 %v1516, 4294901760
    %1559 = vmatpush1.msra.mxu0 %v1558
    %1560 = vmatprep.subr.mxu0 0.0
    %v1561 = vand.u32 %v1517, 4294901760
    %1562 = vmatpush1.msra.mxu0 %v1561
    %1563 = vmatprep.subr.mxu0 0.0
    %v1564 = vand.u32 %v1518, 4294901760
    %1565 = vmatpush1.msra.mxu0 %v1564
    %1566 = vmatprep.subr.mxu0 0.0
    %v1567 = vand.u32 %v1519, 4294901760
    %1568 = vmatpush1.msra.mxu0 %v1567
    %1569 = vmatprep.subr.mxu0 0.0
    %v1570 = vand.u32 %v1520, 4294901760
    %1571 = vmatpush1.msra.mxu0 %v1570
    %1572 = vmatprep.subr.mxu0 0.0
    %v1573 = vand.u32 %v1521, 4294901760
    %1574 = vmatpush1.msra.mxu0 %v1573
    %1575 = vmatprep.subr.mxu0 0.0
    %1576 = vmatpush1.msra.mxu0 0.0
    %1577 = vmatprep.subr.mxu0 0.0
    %1578 = vmatpush1.msra.mxu0 0.0
    %1579 = vmatprep.subr.mxu0 0.0
    %1580 = vmatpush1.msra.mxu0 0.0
    %1581 = vmatprep.subr.mxu0 0.0
    %1582 = vmatpush1.msra.mxu0 0.0
    %1583 = vmatprep.subr.mxu0 0.0
    %1584 = vmatpush1.msra.mxu0 0.0
    %1585 = vmatprep.subr.mxu0 0.0
    %1586 = vmatpush1.msra.mxu0 0.0
    %1587 = vmatprep.subr.mxu0 0.0
    %1588 = vmatpush1.msra.mxu0 0.0
    %1589 = vmatprep.subr.mxu0 0.0
    %1590 = vmatpush1.msra.mxu0 0.0
    %1591 = vmatprep.subr.mxu0 0.0
    %1592 = vmatpush1.msra.mxu0 0.0
    %1593 = vmatprep.subr.mxu0 0.0
    %1594 = vmatpush1.msra.mxu0 0.0
    %1595 = vmatprep.subr.mxu0 0.0
    %1596 = vmatpush1.msra.mxu0 0.0
    %1597 = vmatprep.subr.mxu0 0.0
    %1598 = vmatpush1.msra.mxu0 0.0
    %1599 = vmatprep.subr.mxu0 0.0
    %1600 = vmatpush1.msra.mxu0 0.0
    %1601 = vmatprep.subr.mxu0 0.0
    %1602 = vmatpush1.msra.mxu0 0.0
    %1603 = vmatprep.subr.mxu0 0.0
    %1604 = vmatpush1.msra.mxu0 0.0
    %1605 = vmatprep.subr.mxu0 0.0
    %1606 = vmatpush1.msra.mxu0 0.0
    %1607 = vmatprep.mubr.f32.mxu0 0.0
    %v1608 = vand.u32 %v1522, 4294901760
    %v1609 = vsub.f32 %v1522, %v1608
    %v1610 = vand.u32 %v1609, 4294901760
    %v1611 = vsub.f32 %v1609, %v1610
    %v1612 = vand.u32 %v1611, 4294901760
    %1613 = vmatmul.mubr.f32.gmra.mrb[0].mxu0 %v1612
    %v1614 = vpop.f32.mrb[0].mxu0
    %v1615 = vadd.f32 %v1525, %v1614
    %v1616 = vpop.f32.mrb[0].mxu0
    %1617 = vdwg.mxu0
    %1618 = vmatprep.subr.mxu0 0.0
    %v1619 = vand.u32 %v1506, 4294901760
    %v1620 = vsub.f32 %v1506, %v1619
    %v1621 = vand.u32 %v1620, 4294901760
    %v1622 = vsub.f32 %v1620, %v1621
    %v1623 = vand.u32 %v1622, 4294901760
    %1624 = vmatpush1.msra.mxu0 %v1623
    %1625 = vmatprep.subr.mxu0 0.0
    %v1626 = vand.u32 %v1507, 4294901760
    %v1627 = vsub.f32 %v1507, %v1626
    %v1628 = vand.u32 %v1627, 4294901760
    %v1629 = vsub.f32 %v1627, %v1628
    %v1630 = vand.u32 %v1629, 4294901760
    %1631 = vmatpush1.msra.mxu0 %v1630
    %1632 = vmatprep.subr.mxu0 0.0
    %v1633 = vand.u32 %v1508, 4294901760
    %v1634 = vsub.f32 %v1508, %v1633
    %v1635 = vand.u32 %v1634, 4294901760
    %v1636 = vsub.f32 %v1634, %v1635
    %v1637 = vand.u32 %v1636, 4294901760
    %1638 = vmatpush1.msra.mxu0 %v1637
    %1639 = vmatprep.subr.mxu0 0.0
    %v1640 = vand.u32 %v1509, 4294901760
    %v1641 = vsub.f32 %v1509, %v1640
    %v1642 = vand.u32 %v1641, 4294901760
    %v1643 = vsub.f32 %v1641, %v1642
    %v1644 = vand.u32 %v1643, 4294901760
    %1645 = vmatpush1.msra.mxu0 %v1644
    %1646 = vmatprep.subr.mxu0 0.0
    %v1647 = vand.u32 %v1510, 4294901760
    %v1648 = vsub.f32 %v1510, %v1647
    %v1649 = vand.u32 %v1648, 4294901760
    %v1650 = vsub.f32 %v1648, %v1649
    %v1651 = vand.u32 %v1650, 4294901760
    %1652 = vmatpush1.msra.mxu0 %v1651
    %1653 = vmatprep.subr.mxu0 0.0
    %v1654 = vand.u32 %v1511, 4294901760
    %v1655 = vsub.f32 %v1511, %v1654
    %v1656 = vand.u32 %v1655, 4294901760
    %v1657 = vsub.f32 %v1655, %v1656
    %v1658 = vand.u32 %v1657, 4294901760
    %1659 = vmatpush1.msra.mxu0 %v1658
    %1660 = vmatprep.subr.mxu0 0.0
    %v1661 = vand.u32 %v1512, 4294901760
    %v1662 = vsub.f32 %v1512, %v1661
    %v1663 = vand.u32 %v1662, 4294901760
    %v1664 = vsub.f32 %v1662, %v1663
    %v1665 = vand.u32 %v1664, 4294901760
    %1666 = vmatpush1.msra.mxu0 %v1665
    %1667 = vmatprep.subr.mxu0 0.0
    %v1668 = vand.u32 %v1513, 4294901760
    %v1669 = vsub.f32 %v1513, %v1668
    %v1670 = vand.u32 %v1669, 4294901760
    %v1671 = vsub.f32 %v1669, %v1670
    %v1672 = vand.u32 %v1671, 4294901760
    %1673 = vmatpush1.msra.mxu0 %v1672
    %1674 = vmatprep.subr.mxu0 0.0
    %v1675 = vand.u32 %v1514, 4294901760
    %v1676 = vsub.f32 %v1514, %v1675
    %v1677 = vand.u32 %v1676, 4294901760
    %v1678 = vsub.f32 %v1676, %v1677
    %v1679 = vand.u32 %v1678, 4294901760
    %1680 = vmatpush1.msra.mxu0 %v1679
    %1681 = vmatprep.subr.mxu0 0.0
    %v1682 = vand.u32 %v1515, 4294901760
    %v1683 = vsub.f32 %v1515, %v1682
    %v1684 = vand.u32 %v1683, 4294901760
    %v1685 = vsub.f32 %v1683, %v1684
    %v1686 = vand.u32 %v1685, 4294901760
    %1687 = vmatpush1.msra.mxu0 %v1686
    %1688 = vmatprep.subr.mxu0 0.0
    %v1689 = vand.u32 %v1516, 4294901760
    %v1690 = vsub.f32 %v1516, %v1689
    %v1691 = vand.u32 %v1690, 4294901760
    %v1692 = vsub.f32 %v1690, %v1691
    %v1693 = vand.u32 %v1692, 4294901760
    %1694 = vmatpush1.msra.mxu0 %v1693
    %1695 = vmatprep.subr.mxu0 0.0
    %v1696 = vand.u32 %v1517, 4294901760
    %v1697 = vsub.f32 %v1517, %v1696
    %v1698 = vand.u32 %v1697, 4294901760
    %v1699 = vsub.f32 %v1697, %v1698
    %v1700 = vand.u32 %v1699, 4294901760
    %1701 = vmatpush1.msra.mxu0 %v1700
    %1702 = vmatprep.subr.mxu0 0.0
    %v1703 = vand.u32 %v1518, 4294901760
    %v1704 = vsub.f32 %v1518, %v1703
    %v1705 = vand.u32 %v1704, 4294901760
    %v1706 = vsub.f32 %v1704, %v1705
    %v1707 = vand.u32 %v1706, 4294901760
    %1708 = vmatpush1.msra.mxu0 %v1707
    %1709 = vmatprep.subr.mxu0 0.0
    %v1710 = vand.u32 %v1519, 4294901760
    %v1711 = vsub.f32 %v1519, %v1710
    %v1712 = vand.u32 %v1711, 4294901760
    %v1713 = vsub.f32 %v1711, %v1712
    %v1714 = vand.u32 %v1713, 4294901760
    %1715 = vmatpush1.msra.mxu0 %v1714
    %1716 = vmatprep.subr.mxu0 0.0
    %v1717 = vand.u32 %v1520, 4294901760
    %v1718 = vsub.f32 %v1520, %v1717
    %v1719 = vand.u32 %v1718, 4294901760
    %v1720 = vsub.f32 %v1718, %v1719
    %v1721 = vand.u32 %v1720, 4294901760
    %1722 = vmatpush1.msra.mxu0 %v1721
    %1723 = vmatprep.subr.mxu0 0.0
    %v1724 = vand.u32 %v1521, 4294901760
    %v1725 = vsub.f32 %v1521, %v1724
    %v1726 = vand.u32 %v1725, 4294901760
    %v1727 = vsub.f32 %v1725, %v1726
    %v1728 = vand.u32 %v1727, 4294901760
    %1729 = vmatpush1.msra.mxu0 %v1728
    %1730 = vmatprep.subr.mxu0 0.0
    %1731 = vmatpush1.msra.mxu0 0.0
    %1732 = vmatprep.subr.mxu0 0.0
    %1733 = vmatpush1.msra.mxu0 0.0
    %1734 = vmatprep.subr.mxu0 0.0
    %1735 = vmatpush1.msra.mxu0 0.0
    %1736 = vmatprep.subr.mxu0 0.0
    %1737 = vmatpush1.msra.mxu0 0.0
    %1738 = vmatprep.subr.mxu0 0.0
    %1739 = vmatpush1.msra.mxu0 0.0
    %1740 = vmatprep.subr.mxu0 0.0
    %1741 = vmatpush1.msra.mxu0 0.0
    %1742 = vmatprep.subr.mxu0 0.0
    %1743 = vmatpush1.msra.mxu0 0.0
    %1744 = vmatprep.subr.mxu0 0.0
    %1745 = vmatpush1.msra.mxu0 0.0
    %1746 = vmatprep.subr.mxu0 0.0
    %1747 = vmatpush1.msra.mxu0 0.0
    %1748 = vmatprep.subr.mxu0 0.0
    %1749 = vmatpush1.msra.mxu0 0.0
    %1750 = vmatprep.subr.mxu0 0.0
    %1751 = vmatpush1.msra.mxu0 0.0
    %1752 = vmatprep.subr.mxu0 0.0
    %1753 = vmatpush1.msra.mxu0 0.0
    %1754 = vmatprep.subr.mxu0 0.0
    %1755 = vmatpush1.msra.mxu0 0.0
    %1756 = vmatprep.subr.mxu0 0.0
    %1757 = vmatpush1.msra.mxu0 0.0
    %1758 = vmatprep.subr.mxu0 0.0
    %1759 = vmatpush1.msra.mxu0 0.0
    %1760 = vmatprep.subr.mxu0 0.0
    %1761 = vmatpush1.msra.mxu0 0.0
    %1762 = vmatprep.mubr.f32.mxu0 0.0
    %v1763 = vand.u32 %v1522, 4294901760
    %1764 = vmatmul.mubr.f32.gmra.mrb[0].mxu0 %v1763
    %v1765 = vpop.f32.mrb[0].mxu0
    %v1766 = vadd.f32 %v1615, %v1765
    %v1767 = vpop.f32.mrb[0].mxu0
    %1768 = vdwg.mxu0
    %1769 = vmatprep.subr.mxu0 0.0
    %v1770 = vand.u32 %v1506, 4294901760
    %v1771 = vsub.f32 %v1506, %v1770
    %1772 = vmatpush1.msra.mxu0 %v1771
    %1773 = vmatprep.subr.mxu0 0.0
    %v1774 = vand.u32 %v1507, 4294901760
    %v1775 = vsub.f32 %v1507, %v1774
    %1776 = vmatpush1.msra.mxu0 %v1775
    %1777 = vmatprep.subr.mxu0 0.0
    %v1778 = vand.u32 %v1508, 4294901760
    %v1779 = vsub.f32 %v1508, %v1778
    %1780 = vmatpush1.msra.mxu0 %v1779
    %1781 = vmatprep.subr.mxu0 0.0
    %v1782 = vand.u32 %v1509, 4294901760
    %v1783 = vsub.f32 %v1509, %v1782
    %1784 = vmatpush1.msra.mxu0 %v1783
    %1785 = vmatprep.subr.mxu0 0.0
    %v1786 = vand.u32 %v1510, 4294901760
    %v1787 = vsub.f32 %v1510, %v1786
    %1788 = vmatpush1.msra.mxu0 %v1787
    %1789 = vmatprep.subr.mxu0 0.0
    %v1790 = vand.u32 %v1511, 4294901760
    %v1791 = vsub.f32 %v1511, %v1790
    %1792 = vmatpush1.msra.mxu0 %v1791
    %1793 = vmatprep.subr.mxu0 0.0
    %v1794 = vand.u32 %v1512, 4294901760
    %v1795 = vsub.f32 %v1512, %v1794
    %1796 = vmatpush1.msra.mxu0 %v1795
    %1797 = vmatprep.subr.mxu0 0.0
    %v1798 = vand.u32 %v1513, 4294901760
    %v1799 = vsub.f32 %v1513, %v1798
    %1800 = vmatpush1.msra.mxu0 %v1799
    %1801 = vmatprep.subr.mxu0 0.0
    %v1802 = vand.u32 %v1514, 4294901760
    %v1803 = vsub.f32 %v1514, %v1802
    %1804 = vmatpush1.msra.mxu0 %v1803
    %1805 = vmatprep.subr.mxu0 0.0
    %v1806 = vand.u32 %v1515, 4294901760
    %v1807 = vsub.f32 %v1515, %v1806
    %1808 = vmatpush1.msra.mxu0 %v1807
    %1809 = vmatprep.subr.mxu0 0.0
    %v1810 = vand.u32 %v1516, 4294901760
    %v1811 = vsub.f32 %v1516, %v1810
    %1812 = vmatpush1.msra.mxu0 %v1811
    %1813 = vmatprep.subr.mxu0 0.0
    %v1814 = vand.u32 %v1517, 4294901760
    %v1815 = vsub.f32 %v1517, %v1814
    %1816 = vmatpush1.msra.mxu0 %v1815
    %1817 = vmatprep.subr.mxu0 0.0
    %v1818 = vand.u32 %v1518, 4294901760
    %v1819 = vsub.f32 %v1518, %v1818
    %1820 = vmatpush1.msra.mxu0 %v1819
    %1821 = vmatprep.subr.mxu0 0.0
    %v1822 = vand.u32 %v1519, 4294901760
    %v1823 = vsub.f32 %v1519, %v1822
    %1824 = vmatpush1.msra.mxu0 %v1823
    %1825 = vmatprep.subr.mxu0 0.0
    %v1826 = vand.u32 %v1520, 4294901760
    %v1827 = vsub.f32 %v1520, %v1826
    %1828 = vmatpush1.msra.mxu0 %v1827
    %1829 = vmatprep.subr.mxu0 0.0
    %v1830 = vand.u32 %v1521, 4294901760
    %v1831 = vsub.f32 %v1521, %v1830
    %1832 = vmatpush1.msra.mxu0 %v1831
    %1833 = vmatprep.subr.mxu0 0.0
    %1834 = vmatpush1.msra.mxu0 0.0
    %1835 = vmatprep.subr.mxu0 0.0
    %1836 = vmatpush1.msra.mxu0 0.0
    %1837 = vmatprep.subr.mxu0 0.0
    %1838 = vmatpush1.msra.mxu0 0.0
    %1839 = vmatprep.subr.mxu0 0.0
    %1840 = vmatpush1.msra.mxu0 0.0
    %1841 = vmatprep.subr.mxu0 0.0
    %1842 = vmatpush1.msra.mxu0 0.0
    %1843 = vmatprep.subr.mxu0 0.0
    %1844 = vmatpush1.msra.mxu0 0.0
    %1845 = vmatprep.subr.mxu0 0.0
    %1846 = vmatpush1.msra.mxu0 0.0
    %1847 = vmatprep.subr.mxu0 0.0
    %1848 = vmatpush1.msra.mxu0 0.0
    %1849 = vmatprep.subr.mxu0 0.0
    %1850 = vmatpush1.msra.mxu0 0.0
    %1851 = vmatprep.subr.mxu0 0.0
    %1852 = vmatpush1.msra.mxu0 0.0
    %1853 = vmatprep.subr.mxu0 0.0
    %1854 = vmatpush1.msra.mxu0 0.0
    %1855 = vmatprep.subr.mxu0 0.0
    %1856 = vmatpush1.msra.mxu0 0.0
    %1857 = vmatprep.subr.mxu0 0.0
    %1858 = vmatpush1.msra.mxu0 0.0
    %1859 = vmatprep.subr.mxu0 0.0
    %1860 = vmatpush1.msra.mxu0 0.0
    %1861 = vmatprep.subr.mxu0 0.0
    %1862 = vmatpush1.msra.mxu0 0.0
    %1863 = vmatprep.subr.mxu0 0.0
    %1864 = vmatpush1.msra.mxu0 0.0
    %1865 = vmatprep.mubr.f32.mxu0 0.0
    %v1866 = vand.u32 %v1522, 4294901760
    %v1867 = vsub.f32 %v1522, %v1866
    %1868 = vmatmul.mubr.f32.gmra.mrb[0].mxu0 %v1867
    %v1869 = vpop.f32.mrb[0].mxu0
    %v1870 = vadd.f32 %v1766, %v1869
    %v1871 = vpop.f32.mrb[0].mxu0
    %1872 = vdwg.mxu0
    %1873 = vmatprep.subr.mxu0 0.0
    %v1874 = vand.u32 %v1506, 4294901760
    %1875 = vmatpush1.msra.mxu0 %v1874
    %1876 = vmatprep.subr.mxu0 0.0
    %v1877 = vand.u32 %v1507, 4294901760
    %1878 = vmatpush1.msra.mxu0 %v1877
    %1879 = vmatprep.subr.mxu0 0.0
    %v1880 = vand.u32 %v1508, 4294901760
    %1881 = vmatpush1.msra.mxu0 %v1880
    %1882 = vmatprep.subr.mxu0 0.0
    %v1883 = vand.u32 %v1509, 4294901760
    %1884 = vmatpush1.msra.mxu0 %v1883
    %1885 = vmatprep.subr.mxu0 0.0
    %v1886 = vand.u32 %v1510, 4294901760
    %1887 = vmatpush1.msra.mxu0 %v1886
    %1888 = vmatprep.subr.mxu0 0.0
    %v1889 = vand.u32 %v1511, 4294901760
    %1890 = vmatpush1.msra.mxu0 %v1889
    %1891 = vmatprep.subr.mxu0 0.0
    %v1892 = vand.u32 %v1512, 4294901760
    %1893 = vmatpush1.msra.mxu0 %v1892
    %1894 = vmatprep.subr.mxu0 0.0
    %v1895 = vand.u32 %v1513, 4294901760
    %1896 = vmatpush1.msra.mxu0 %v1895
    %1897 = vmatprep.subr.mxu0 0.0
    %v1898 = vand.u32 %v1514, 4294901760
    %1899 = vmatpush1.msra.mxu0 %v1898
    %1900 = vmatprep.subr.mxu0 0.0
    %v1901 = vand.u32 %v1515, 4294901760
    %1902 = vmatpush1.msra.mxu0 %v1901
    %1903 = vmatprep.subr.mxu0 0.0
    %v1904 = vand.u32 %v1516, 4294901760
    %1905 = vmatpush1.msra.mxu0 %v1904
    %1906 = vmatprep.subr.mxu0 0.0
    %v1907 = vand.u32 %v1517, 4294901760
    %1908 = vmatpush1.msra.mxu0 %v1907
    %1909 = vmatprep.subr.mxu0 0.0
    %v1910 = vand.u32 %v1518, 4294901760
    %1911 = vmatpush1.msra.mxu0 %v1910
    %1912 = vmatprep.subr.mxu0 0.0
    %v1913 = vand.u32 %v1519, 4294901760
    %1914 = vmatpush1.msra.mxu0 %v1913
    %1915 = vmatprep.subr.mxu0 0.0
    %v1916 = vand.u32 %v1520, 4294901760
    %1917 = vmatpush1.msra.mxu0 %v1916
    %1918 = vmatprep.subr.mxu0 0.0
    %v1919 = vand.u32 %v1521, 4294901760
    %1920 = vmatpush1.msra.mxu0 %v1919
    %1921 = vmatprep.subr.mxu0 0.0
    %1922 = vmatpush1.msra.mxu0 0.0
    %1923 = vmatprep.subr.mxu0 0.0
    %1924 = vmatpush1.msra.mxu0 0.0
    %1925 = vmatprep.subr.mxu0 0.0
    %1926 = vmatpush1.msra.mxu0 0.0
    %1927 = vmatprep.subr.mxu0 0.0
    %1928 = vmatpush1.msra.mxu0 0.0
    %1929 = vmatprep.subr.mxu0 0.0
    %1930 = vmatpush1.msra.mxu0 0.0
    %1931 = vmatprep.subr.mxu0 0.0
    %1932 = vmatpush1.msra.mxu0 0.0
    %1933 = vmatprep.subr.mxu0 0.0
    %1934 = vmatpush1.msra.mxu0 0.0
    %1935 = vmatprep.subr.mxu0 0.0
    %1936 = vmatpush1.msra.mxu0 0.0
    %1937 = vmatprep.subr.mxu0 0.0
    %1938 = vmatpush1.msra.mxu0 0.0
    %1939 = vmatprep.subr.mxu0 0.0
    %1940 = vmatpush1.msra.mxu0 0.0
    %1941 = vmatprep.subr.mxu0 0.0
    %1942 = vmatpush1.msra.mxu0 0.0
    %1943 = vmatprep.subr.mxu0 0.0
    %1944 = vmatpush1.msra.mxu0 0.0
    %1945 = vmatprep.subr.mxu0 0.0
    %1946 = vmatpush1.msra.mxu0 0.0
    %1947 = vmatprep.subr.mxu0 0.0
    %1948 = vmatpush1.msra.mxu0 0.0
    %1949 = vmatprep.subr.mxu0 0.0
    %1950 = vmatpush1.msra.mxu0 0.0
    %1951 = vmatprep.subr.mxu0 0.0
    %1952 = vmatpush1.msra.mxu0 0.0
    %1953 = vmatprep.mubr.f32.mxu0 0.0
    %v1954 = vand.u32 %v1522, 4294901760
    %v1955 = vsub.f32 %v1522, %v1954
    %v1956 = vand.u32 %v1955, 4294901760
    %1957 = vmatmul.mubr.f32.gmra.mrb[0].mxu0 %v1956
    %v1958 = vpop.f32.mrb[0].mxu0
    %v1959 = vadd.f32 %v1870, %v1958
    %v1960 = vpop.f32.mrb[0].mxu0
    %1961 = vdwg.mxu0
    %1962 = vmatprep.subr.mxu0 0.0
    %v1963 = vand.u32 %v1506, 4294901760
    %v1964 = vsub.f32 %v1506, %v1963
    %v1965 = vand.u32 %v1964, 4294901760
    %1966 = vmatpush1.msra.mxu0 %v1965
    %1967 = vmatprep.subr.mxu0 0.0
    %v1968 = vand.u32 %v1507, 4294901760
    %v1969 = vsub.f32 %v1507, %v1968
    %v1970 = vand.u32 %v1969, 4294901760
    %1971 = vmatpush1.msra.mxu0 %v1970
    %1972 = vmatprep.subr.mxu0 0.0
    %v1973 = vand.u32 %v1508, 4294901760
    %v1974 = vsub.f32 %v1508, %v1973
    %v1975 = vand.u32 %v1974, 4294901760
    %1976 = vmatpush1.msra.mxu0 %v1975
    %1977 = vmatprep.subr.mxu0 0.0
    %v1978 = vand.u32 %v1509, 4294901760
    %v1979 = vsub.f32 %v1509, %v1978
    %v1980 = vand.u32 %v1979, 4294901760
    %1981 = vmatpush1.msra.mxu0 %v1980
    %1982 = vmatprep.subr.mxu0 0.0
    %v1983 = vand.u32 %v1510, 4294901760
    %v1984 = vsub.f32 %v1510, %v1983
    %v1985 = vand.u32 %v1984, 4294901760
    %1986 = vmatpush1.msra.mxu0 %v1985
    %1987 = vmatprep.subr.mxu0 0.0
    %v1988 = vand.u32 %v1511, 4294901760
    %v1989 = vsub.f32 %v1511, %v1988
    %v1990 = vand.u32 %v1989, 4294901760
    %1991 = vmatpush1.msra.mxu0 %v1990
    %1992 = vmatprep.subr.mxu0 0.0
    %v1993 = vand.u32 %v1512, 4294901760
    %v1994 = vsub.f32 %v1512, %v1993
    %v1995 = vand.u32 %v1994, 4294901760
    %1996 = vmatpush1.msra.mxu0 %v1995
    %1997 = vmatprep.subr.mxu0 0.0
    %v1998 = vand.u32 %v1513, 4294901760
    %v1999 = vsub.f32 %v1513, %v1998
    %v2000 = vand.u32 %v1999, 4294901760
    %2001 = vmatpush1.msra.mxu0 %v2000
    %2002 = vmatprep.subr.mxu0 0.0
    %v2003 = vand.u32 %v1514, 4294901760
    %v2004 = vsub.f32 %v1514, %v2003
    %v2005 = vand.u32 %v2004, 4294901760
    %2006 = vmatpush1.msra.mxu0 %v2005
    %2007 = vmatprep.subr.mxu0 0.0
    %v2008 = vand.u32 %v1515, 4294901760
    %v2009 = vsub.f32 %v1515, %v2008
    %v2010 = vand.u32 %v2009, 4294901760
    %2011 = vmatpush1.msra.mxu0 %v2010
    %2012 = vmatprep.subr.mxu0 0.0
    %v2013 = vand.u32 %v1516, 4294901760
    %v2014 = vsub.f32 %v1516, %v2013
    %v2015 = vand.u32 %v2014, 4294901760
    %2016 = vmatpush1.msra.mxu0 %v2015
    %2017 = vmatprep.subr.mxu0 0.0
    %v2018 = vand.u32 %v1517, 4294901760
    %v2019 = vsub.f32 %v1517, %v2018
    %v2020 = vand.u32 %v2019, 4294901760
    %2021 = vmatpush1.msra.mxu0 %v2020
    %2022 = vmatprep.subr.mxu0 0.0
    %v2023 = vand.u32 %v1518, 4294901760
    %v2024 = vsub.f32 %v1518, %v2023
    %v2025 = vand.u32 %v2024, 4294901760
    %2026 = vmatpush1.msra.mxu0 %v2025
    %2027 = vmatprep.subr.mxu0 0.0
    %v2028 = vand.u32 %v1519, 4294901760
    %v2029 = vsub.f32 %v1519, %v2028
    %v2030 = vand.u32 %v2029, 4294901760
    %2031 = vmatpush1.msra.mxu0 %v2030
    %2032 = vmatprep.subr.mxu0 0.0
    %v2033 = vand.u32 %v1520, 4294901760
    %v2034 = vsub.f32 %v1520, %v2033
    %v2035 = vand.u32 %v2034, 4294901760
    %2036 = vmatpush1.msra.mxu0 %v2035
    %2037 = vmatprep.subr.mxu0 0.0
    %v2038 = vand.u32 %v1521, 4294901760
    %v2039 = vsub.f32 %v1521, %v2038
    %v2040 = vand.u32 %v2039, 4294901760
    %2041 = vmatpush1.msra.mxu0 %v2040
    %2042 = vmatprep.subr.mxu0 0.0
    %2043 = vmatpush1.msra.mxu0 0.0
    %2044 = vmatprep.subr.mxu0 0.0
    %2045 = vmatpush1.msra.mxu0 0.0
    %2046 = vmatprep.subr.mxu0 0.0
    %2047 = vmatpush1.msra.mxu0 0.0
    %2048 = vmatprep.subr.mxu0 0.0
    %2049 = vmatpush1.msra.mxu0 0.0
    %2050 = vmatprep.subr.mxu0 0.0
    %2051 = vmatpush1.msra.mxu0 0.0
    %2052 = vmatprep.subr.mxu0 0.0
    %2053 = vmatpush1.msra.mxu0 0.0
    %2054 = vmatprep.subr.mxu0 0.0
    %2055 = vmatpush1.msra.mxu0 0.0
    %2056 = vmatprep.subr.mxu0 0.0
    %2057 = vmatpush1.msra.mxu0 0.0
    %2058 = vmatprep.subr.mxu0 0.0
    %2059 = vmatpush1.msra.mxu0 0.0
    %2060 = vmatprep.subr.mxu0 0.0
    %2061 = vmatpush1.msra.mxu0 0.0
    %2062 = vmatprep.subr.mxu0 0.0
    %2063 = vmatpush1.msra.mxu0 0.0
    %2064 = vmatprep.subr.mxu0 0.0
    %2065 = vmatpush1.msra.mxu0 0.0
    %2066 = vmatprep.subr.mxu0 0.0
    %2067 = vmatpush1.msra.mxu0 0.0
    %2068 = vmatprep.subr.mxu0 0.0
    %2069 = vmatpush1.msra.mxu0 0.0
    %2070 = vmatprep.subr.mxu0 0.0
    %2071 = vmatpush1.msra.mxu0 0.0
    %2072 = vmatprep.subr.mxu0 0.0
    %2073 = vmatpush1.msra.mxu0 0.0
    %2074 = vmatprep.mubr.f32.mxu0 0.0
    %v2075 = vand.u32 %v1522, 4294901760
    %2076 = vmatmul.mubr.f32.gmra.mrb[0].mxu0 %v2075
    %v2077 = vpop.f32.mrb[0].mxu0
    %v2078 = vadd.f32 %v1959, %v2077
    %v2079 = vpop.f32.mrb[0].mxu0
    %2080 = vdwg.mxu0
    %2081 = vmatprep.subr.mxu0 0.0
    %v2082 = vand.u32 %v1506, 4294901760
    %2083 = vmatpush1.msra.mxu0 %v2082
    %2084 = vmatprep.subr.mxu0 0.0
    %v2085 = vand.u32 %v1507, 4294901760
    %2086 = vmatpush1.msra.mxu0 %v2085
    %2087 = vmatprep.subr.mxu0 0.0
    %v2088 = vand.u32 %v1508, 4294901760
    %2089 = vmatpush1.msra.mxu0 %v2088
    %2090 = vmatprep.subr.mxu0 0.0
    %v2091 = vand.u32 %v1509, 4294901760
    %2092 = vmatpush1.msra.mxu0 %v2091
    %2093 = vmatprep.subr.mxu0 0.0
    %v2094 = vand.u32 %v1510, 4294901760
    %2095 = vmatpush1.msra.mxu0 %v2094
    %2096 = vmatprep.subr.mxu0 0.0
    %v2097 = vand.u32 %v1511, 4294901760
    %2098 = vmatpush1.msra.mxu0 %v2097
    %2099 = vmatprep.subr.mxu0 0.0
    %v2100 = vand.u32 %v1512, 4294901760
    %2101 = vmatpush1.msra.mxu0 %v2100
    %2102 = vmatprep.subr.mxu0 0.0
    %v2103 = vand.u32 %v1513, 4294901760
    %2104 = vmatpush1.msra.mxu0 %v2103
    %2105 = vmatprep.subr.mxu0 0.0
    %v2106 = vand.u32 %v1514, 4294901760
    %2107 = vmatpush1.msra.mxu0 %v2106
    %2108 = vmatprep.subr.mxu0 0.0
    %v2109 = vand.u32 %v1515, 4294901760
    %2110 = vmatpush1.msra.mxu0 %v2109
    %2111 = vmatprep.subr.mxu0 0.0
    %v2112 = vand.u32 %v1516, 4294901760
    %2113 = vmatpush1.msra.mxu0 %v2112
    %2114 = vmatprep.subr.mxu0 0.0
    %v2115 = vand.u32 %v1517, 4294901760
    %2116 = vmatpush1.msra.mxu0 %v2115
    %2117 = vmatprep.subr.mxu0 0.0
    %v2118 = vand.u32 %v1518, 4294901760
    %2119 = vmatpush1.msra.mxu0 %v2118
    %2120 = vmatprep.subr.mxu0 0.0
    %v2121 = vand.u32 %v1519, 4294901760
    %2122 = vmatpush1.msra.mxu0 %v2121
    %2123 = vmatprep.subr.mxu0 0.0
    %v2124 = vand.u32 %v1520, 4294901760
    %2125 = vmatpush1.msra.mxu0 %v2124
    %2126 = vmatprep.subr.mxu0 0.0
    %v2127 = vand.u32 %v1521, 4294901760
    %2128 = vmatpush1.msra.mxu0 %v2127
    %2129 = vmatprep.subr.mxu0 0.0
    %2130 = vmatpush1.msra.mxu0 0.0
    %2131 = vmatprep.subr.mxu0 0.0
    %2132 = vmatpush1.msra.mxu0 0.0
    %2133 = vmatprep.subr.mxu0 0.0
    %2134 = vmatpush1.msra.mxu0 0.0
    %2135 = vmatprep.subr.mxu0 0.0
    %2136 = vmatpush1.msra.mxu0 0.0
    %2137 = vmatprep.subr.mxu0 0.0
    %2138 = vmatpush1.msra.mxu0 0.0
    %2139 = vmatprep.subr.mxu0 0.0
    %2140 = vmatpush1.msra.mxu0 0.0
    %2141 = vmatprep.subr.mxu0 0.0
    %2142 = vmatpush1.msra.mxu0 0.0
    %2143 = vmatprep.subr.mxu0 0.0
    %2144 = vmatpush1.msra.mxu0 0.0
    %2145 = vmatprep.subr.mxu0 0.0
    %2146 = vmatpush1.msra.mxu0 0.0
    %2147 = vmatprep.subr.mxu0 0.0
    %2148 = vmatpush1.msra.mxu0 0.0
    %2149 = vmatprep.subr.mxu0 0.0
    %2150 = vmatpush1.msra.mxu0 0.0
    %2151 = vmatprep.subr.mxu0 0.0
    %2152 = vmatpush1.msra.mxu0 0.0
    %2153 = vmatprep.subr.mxu0 0.0
    %2154 = vmatpush1.msra.mxu0 0.0
    %2155 = vmatprep.subr.mxu0 0.0
    %2156 = vmatpush1.msra.mxu0 0.0
    %2157 = vmatprep.subr.mxu0 0.0
    %2158 = vmatpush1.msra.mxu0 0.0
    %2159 = vmatprep.subr.mxu0 0.0
    %2160 = vmatpush1.msra.mxu0 0.0
    %2161 = vmatprep.mubr.f32.mxu0 0.0
    %v2162 = vand.u32 %v1522, 4294901760
    %2163 = vmatmul.mubr.f32.gmra.mrb[0].mxu0 %v2162
    %v2164 = vpop.f32.mrb[0].mxu0
    %v2165 = vadd.f32 %v2078, %v2164
    %v2166 = vpop.f32.mrb[0].mxu0
    %2167 = vdwg.mxu0
    %v2168 = vtanh.pop %v2165
    %2169 = vst [vmem:[#allocation2] sm:$0xff] %v2168
    // Predicated region
    $region18: #{tpu_custom_call.1} parent=1 // pred_check
      _
    $region19: #{tpu_custom_call.1} parent=1 // pred_check_branch
      %2171 = sbr.rel (0) target = $region21
    $region20: #{tpu_custom_call.1} parent=1 // pred_region
      %s2173 = ssub.s32 128, 128
      %2174 = vsyncadd [#allocation3], %s2173
      %s2176 = sshll.u32 [#allocation2], 4
      %s2177 = int_to_ptr.vmem [resolvable:$true] %s2176
      %2179 = dma.vmem_to_hbm [thread:$0]  %s2177, 128, %s4, [#allocation3]
    $region21: #{tpu_custom_call.1} parent=1 // pred_fallthru
      _
    // Predicated region
    $region22: #{tpu_custom_call.1} parent=1 // pred_check
      _
    $region23: #{tpu_custom_call.1} parent=1 // pred_check_branch
      %2181 = sbr.rel (0) target = $region25
    $region24: #{tpu_custom_call.1} parent=1 // pred_region
      %2182 = dma.done [#allocation3], 128
    $region25: #{tpu_custom_call.1} parent=1 // pred_fallthru
      _
    %2183 = vsyncpa [#allocation3], 1

</llo_original>
